<compile_context>
chip_gen: v7x
topology: tpu7x:2x2x1
jax: 0.10.0
libtpu: 0.0.40
codegen_flags: <defaults>
</compile_context>

<pallas_src>
import math
import functools

import jax
import jax.numpy as jnp
from jax.experimental import pallas as pl
from jax.experimental.pallas import tpu as pltpu


# ------------------------------- tiling helper -------------------------------

def _choose_tile(dim, pref):
    """Largest tile <= pref that evenly divides dim, else the full dim."""
    if dim <= pref:
        return dim
    t = pref
    while t >= 128:
        if dim % t == 0:
            return t
        t //= 2
    return dim


# ------------------------------- Pallas kernels -------------------------------

def _linear_kernel(x_ref, w_ref, b_ref, o_ref, *, relu):
    """Single-pass GEMM (full K in one block): o = x @ w + b (optional ReLU)."""
    y = jnp.dot(x_ref[...].astype(jnp.bfloat16),
                w_ref[...].astype(jnp.bfloat16),
                preferred_element_type=jnp.float32) + b_ref[...]
    if relu:
        y = jnp.maximum(y, 0.0)
    o_ref[...] = y.astype(o_ref.dtype)


def _linear_acc_kernel(x_ref, w_ref, b_ref, o_ref, acc_ref, *, relu):
    """Tiled GEMM with K-accumulation: o = x @ w + b (optional ReLU)."""
    @pl.when(pl.program_id(2) == 0)
    def _():
        acc_ref[...] = jnp.zeros_like(acc_ref)

    acc_ref[...] += jnp.dot(x_ref[...].astype(jnp.bfloat16),
                            w_ref[...].astype(jnp.bfloat16),
                            preferred_element_type=jnp.float32)

    @pl.when(pl.program_id(2) == pl.num_programs(2) - 1)
    def _():
        y = acc_ref[...] + b_ref[...]
        if relu:
            y = jnp.maximum(y, 0.0)
        o_ref[...] = y.astype(o_ref.dtype)


def _make_multi_proj_kernel(n_out):
    """One x read, n_out independent (x @ w_i + b_i) outputs (QKV / KV fusion)."""
    def kernel(*refs):
        x = refs[0][...].astype(jnp.bfloat16)
        for i in range(n_out):
            w_ref = refs[1 + 2 * i]
            b_ref = refs[2 + 2 * i]
            o_ref = refs[1 + 2 * n_out + i]
            y = (jnp.dot(x, w_ref[...].astype(jnp.bfloat16),
                         preferred_element_type=jnp.float32)
                 + b_ref[...])
            o_ref[...] = y.astype(o_ref.dtype)
    return kernel


def _linear_add_ln_kernel(x_ref, w_ref, b_ref, r_ref, g_ref, beta_ref, o_ref):
    """Fused o = LayerNorm((x @ w + b) + residual) with f32 statistics."""
    y = jnp.dot(x_ref[...].astype(jnp.bfloat16),
                w_ref[...].astype(jnp.bfloat16),
                preferred_element_type=jnp.float32) + b_ref[...]
    y = y + r_ref[...]
    mean = jnp.mean(y, axis=-1, keepdims=True)
    var = jnp.mean((y - mean) ** 2, axis=-1, keepdims=True)
    o_ref[...] = ((y - mean) * jax.lax.rsqrt(var + 1e-5) * g_ref[...]
                  + beta_ref[...])


def _ffn_add_ln_kernel(x_ref, w1_ref, b1_ref, w2_ref, b2_ref,
                       g_ref, beta_ref, o_ref):
    """Fused o = LayerNorm(relu(x @ W1 + b1) @ W2 + b2 + x). Residual = own input."""
    x = x_ref[...]                                   # f32, reused as residual
    h = jnp.dot(x.astype(jnp.bfloat16), w1_ref[...].astype(jnp.bfloat16),
                preferred_element_type=jnp.float32) + b1_ref[...]
    h = jnp.maximum(h, 0.0).astype(jnp.bfloat16)
    y = jnp.dot(h, w2_ref[...].astype(jnp.bfloat16),
                preferred_element_type=jnp.float32) + b2_ref[...]
    y = y + x
    mean = jnp.mean(y, axis=-1, keepdims=True)
    var = jnp.mean((y - mean) ** 2, axis=-1, keepdims=True)
    o_ref[...] = ((y - mean) * jax.lax.rsqrt(var + 1e-5) * g_ref[...]
                  + beta_ref[...])


def _make_attn_kernel(n_head, scale):
    """Scaled dot-product attention for all heads of one batch element.

    q_ref/k_ref/v_ref: (1, S, D) bf16 blocks; m_ref: (1, Sq, Sk) float 0/1.
    Heads are sliced statically along lanes inside the kernel, so no wrapper
    transposes and no per-head mask duplication are needed.
    """
    # TODO(synk): for long sequences, tile Sk with an online-softmax (flash-style)
    # accumulator instead of materializing the full (Sq, Sk) score block.
    def kernel(q_ref, k_ref, v_ref, m_ref, o_ref):
        q = q_ref[0]                      # (Sq, D) bf16
        k = k_ref[0]                      # (Sk, D) bf16
        v = v_ref[0]                      # (Sk, D) bf16
        mask = m_ref[0]                   # (Sq, Sk) f32 0/1
        D = q.shape[-1]
        dh = D // n_head
        outs = []
        for h in range(n_head):
            qh = q[:, h * dh:(h + 1) * dh]
            kh = k[:, h * dh:(h + 1) * dh]
            vh = v[:, h * dh:(h + 1) * dh]
            # q @ k^T without an explicit transpose op (MXU transposed-rhs path).
            s = jax.lax.dot_general(qh, kh, (((1,), (1,)), ((), ())),
                                    preferred_element_type=jnp.float32) * scale
            s = jnp.where(mask > 0.0, s, -1e9)
            s = s - jnp.max(s, axis=-1, keepdims=True)
            p = jnp.exp(s)
            p = p * pl.reciprocal(jnp.sum(p, axis=-1, keepdims=True), approx=True)
            outs.append(jnp.dot(p.astype(jnp.bfloat16), vh,
                                preferred_element_type=jnp.float32))
        # single lane-dense store of the full (Sq, D) output
        o_ref[0] = jnp.concatenate(outs, axis=-1).astype(o_ref.dtype)
    return kernel


# ----------------------------- pallas_call wrappers ----------------------------

def linear_pallas(x, w, b, relu=False, out_dtype=jnp.float32,
                  tm=256, tn=256, tk=512):
    """Tiled o = x @ w + b (optional ReLU), bf16 MXU operands, f32 accumulation."""
    M, K = x.shape
    N = w.shape[1]
    tm = _choose_tile(M, tm)
    tn = _choose_tile(N, tn)
    tk = _choose_tile(K, tk)
    b2 = b.reshape(1, N)
    if tk == K:
        # fast path: no K accumulation, no scratch
        return pl.pallas_call(
            functools.partial(_linear_kernel, relu=relu),
            out_shape=jax.ShapeDtypeStruct((M, N), out_dtype),
            grid=(M // tm, N // tn),
            in_specs=[pl.BlockSpec((tm, K), lambda i, j: (i, 0)),
                      pl.BlockSpec((K, tn), lambda i, j: (0, j)),
                      pl.BlockSpec((1, tn), lambda i, j: (0, j))],
            out_specs=pl.BlockSpec((tm, tn), lambda i, j: (i, j)),
            compiler_params=pltpu.CompilerParams(
                dimension_semantics=("parallel", "parallel")),
        )(x, w, b2)
    return pl.pallas_call(
        functools.partial(_linear_acc_kernel, relu=relu),
        out_shape=jax.ShapeDtypeStruct((M, N), out_dtype),
        grid=(M // tm, N // tn, K // tk),
        in_specs=[pl.BlockSpec((tm, tk), lambda i, j, k: (i, k)),
                  pl.BlockSpec((tk, tn), lambda i, j, k: (k, j)),
                  pl.BlockSpec((1, tn), lambda i, j, k: (0, j))],
        out_specs=pl.BlockSpec((tm, tn), lambda i, j, k: (i, j)),
        scratch_shapes=[pltpu.VMEM((tm, tn), jnp.float32)],
        compiler_params=pltpu.CompilerParams(
            dimension_semantics=("parallel", "parallel", "arbitrary")),
    )(x, w, b2)


def multi_proj_pallas(x, wbs, out_dtype=jnp.float32, tm=256):
    """Fused multi-output projection: read x once, emit [x @ w_i + b_i for i]."""
    M, K = x.shape
    n_out = len(wbs)
    tm = _choose_tile(M, tm)
    in_specs = [pl.BlockSpec((tm, K), lambda i: (i, 0))]
    args = [x]
    out_shapes = []
    out_specs = []
    for (w, b) in wbs:
        N = w.shape[1]
        in_specs += [pl.BlockSpec((K, N), lambda i: (0, 0)),
                     pl.BlockSpec((1, N), lambda i: (0, 0))]
        args += [w, b.reshape(1, N)]
        out_shapes.append(jax.ShapeDtypeStruct((M, N), out_dtype))
        out_specs.append(pl.BlockSpec((tm, N), lambda i: (i, 0)))
    outs = pl.pallas_call(
        _make_multi_proj_kernel(n_out),
        out_shape=tuple(out_shapes),
        grid=(M // tm,),
        in_specs=in_specs,
        out_specs=tuple(out_specs),
        compiler_params=pltpu.CompilerParams(dimension_semantics=("parallel",)),
    )(*args)
    if not isinstance(outs, (list, tuple)):
        outs = (outs,)
    return tuple(outs)


def linear_add_ln_pallas(x, w, b, res, g, beta, tm=256):
    """Fused (x @ w + b) + residual -> LayerNorm."""
    M, K = x.shape
    N = w.shape[1]
    tm = _choose_tile(M, tm)
    return pl.pallas_call(
        _linear_add_ln_kernel,
        out_shape=jax.ShapeDtypeStruct((M, N), jnp.float32),
        grid=(M // tm,),
        in_specs=[pl.BlockSpec((tm, K), lambda i: (i, 0)),
                  pl.BlockSpec((K, N), lambda i: (0, 0)),
                  pl.BlockSpec((1, N), lambda i: (0, 0)),
                  pl.BlockSpec((tm, N), lambda i: (i, 0)),
                  pl.BlockSpec((1, N), lambda i: (0, 0)),
                  pl.BlockSpec((1, N), lambda i: (0, 0))],
        out_specs=pl.BlockSpec((tm, N), lambda i: (i, 0)),
        compiler_params=pltpu.CompilerParams(dimension_semantics=("parallel",)),
    )(x, w, b.reshape(1, N), res, g.reshape(1, N), beta.reshape(1, N))


def ffn_add_ln_pallas(x, w1, b1, w2, b2, g, beta, tm=256):
    """Fused relu(x @ W1 + b1) @ W2 + b2 + x -> LayerNorm."""
    M, D = x.shape
    H = w1.shape[1]
    tm = _choose_tile(M, tm)
    return pl.pallas_call(
        _ffn_add_ln_kernel,
        out_shape=jax.ShapeDtypeStruct((M, D), jnp.float32),
        grid=(M // tm,),
        in_specs=[pl.BlockSpec((tm, D), lambda i: (i, 0)),
                  pl.BlockSpec((D, H), lambda i: (0, 0)),
                  pl.BlockSpec((1, H), lambda i: (0, 0)),
                  pl.BlockSpec((H, D), lambda i: (0, 0)),
                  pl.BlockSpec((1, D), lambda i: (0, 0)),
                  pl.BlockSpec((1, D), lambda i: (0, 0)),
                  pl.BlockSpec((1, D), lambda i: (0, 0))],
        out_specs=pl.BlockSpec((tm, D), lambda i: (i, 0)),
        compiler_params=pltpu.CompilerParams(dimension_semantics=("parallel",)),
    )(x, w1, b1.reshape(1, H), w2, b2.reshape(1, D),
      g.reshape(1, D), beta.reshape(1, D))


def attention_pallas(q, k, v, mask, n_head):
    """q: (B, Sq, D), k/v: (B, Sk, D) bf16, mask: (B, Sq, Sk) float 0/1."""
    B, Sq, D = q.shape
    Sk = k.shape[1]
    dh = D // n_head
    kern = _make_attn_kernel(n_head, 1.0 / math.sqrt(dh))
    return pl.pallas_call(
        kern,
        out_shape=jax.ShapeDtypeStruct((B, Sq, D), jnp.float32),
        grid=(B,),
        in_specs=[pl.BlockSpec((1, Sq, D), lambda b: (b, 0, 0)),
                  pl.BlockSpec((1, Sk, D), lambda b: (b, 0, 0)),
                  pl.BlockSpec((1, Sk, D), lambda b: (b, 0, 0)),
                  pl.BlockSpec((1, Sq, Sk), lambda b: (b, 0, 0))],
        out_specs=pl.BlockSpec((1, Sq, D), lambda b: (b, 0, 0)),
        compiler_params=pltpu.CompilerParams(dimension_semantics=("parallel",)),
    )(q, k, v, mask)


# ------------------------------- parameter init --------------------------------

def init_linear(key, din, dout):
    return {"w": jax.random.normal(key, (din, dout), jnp.float32) * 0.02,
            "b": jnp.zeros((dout,), jnp.float32)}


def init_mha(key, d_model):
    ks = jax.random.split(key, 4)
    return {"q": init_linear(ks[0], d_model, d_model),
            "k": init_linear(ks[1], d_model, d_model),
            "v": init_linear(ks[2], d_model, d_model),
            "o": init_linear(ks[3], d_model, d_model)}


def init_ln(d):
    return {"g": jnp.ones((d,), jnp.float32), "b": jnp.zeros((d,), jnp.float32)}


def init_enc_layer(key, d_model, ffn_hidden):
    ks = jax.random.split(key, 3)
    return {"attn": init_mha(ks[0], d_model), "norm1": init_ln(d_model),
            "ffn1": init_linear(ks[1], d_model, ffn_hidden),
            "ffn2": init_linear(ks[2], ffn_hidden, d_model),
            "norm2": init_ln(d_model)}


def init_dec_layer(key, d_model, ffn_hidden):
    ks = jax.random.split(key, 4)
    return {"self_attn": init_mha(ks[0], d_model), "norm1": init_ln(d_model),
            "cross_attn": init_mha(ks[1], d_model), "norm2": init_ln(d_model),
            "ffn1": init_linear(ks[2], d_model, ffn_hidden),
            "ffn2": init_linear(ks[3], ffn_hidden, d_model),
            "norm3": init_ln(d_model)}


def sinusoidal_pe(max_len, d_model, base):
    pos = jnp.arange(max_len, dtype=jnp.float32)[:, None]
    i = jnp.arange(0, d_model, 2, dtype=jnp.float32)[None, :]
    angle = pos / jnp.power(float(base), i / d_model)
    pe = jnp.zeros((max_len, d_model), jnp.float32)
    pe = pe.at[:, 0::2].set(jnp.sin(angle))
    pe = pe.at[:, 1::2].set(jnp.cos(angle))
    return pe


def init_transformer(key, vocab_size, d_model, max_len, base, ffn_hidden, n_layers):
    ks = jax.random.split(key, 3 + 2 * n_layers)
    return {
        "enc_emb": jax.random.normal(ks[0], (vocab_size, d_model), jnp.float32) * 0.02,
        "dec_emb": jax.random.normal(ks[1], (vocab_size, d_model), jnp.float32) * 0.02,
        "pe": sinusoidal_pe(max_len, d_model, base),
        "enc_layers": [init_enc_layer(ks[2 + l], d_model, ffn_hidden)
                       for l in range(n_layers)],
        "dec_layers": [init_dec_layer(ks[2 + n_layers + l], d_model, ffn_hidden)
                       for l in range(n_layers)],
        "out_proj": init_linear(ks[2 + 2 * n_layers], d_model, vocab_size),
    }


# -------------------------------- model forward --------------------------------

def encoder_layer_forward(lp, x, mask3, n_head):
    B, S, D = x.shape
    x2 = x.reshape(B * S, D)
    pa = lp["attn"]
    q, k, v = multi_proj_pallas(
        x2, [(pa["q"]["w"], pa["q"]["b"]),
             (pa["k"]["w"], pa["k"]["b"]),
             (pa["v"]["w"], pa["v"]["b"])], out_dtype=jnp.bfloat16)
    o = attention_pallas(q.reshape(B, S, D), k.reshape(B, S, D),
                         v.reshape(B, S, D), mask3, n_head)
    # out-proj + residual + LayerNorm fused
    x2 = linear_add_ln_pallas(o.reshape(B * S, D), pa["o"]["w"], pa["o"]["b"],
                              x2, lp["norm1"]["g"], lp["norm1"]["b"])
    # FFN + residual + LayerNorm fused
    x2 = ffn_add_ln_pallas(x2, lp["ffn1"]["w"], lp["ffn1"]["b"],
                           lp["ffn2"]["w"], lp["ffn2"]["b"],
                           lp["norm2"]["g"], lp["norm2"]["b"])
    return x2.reshape(B, S, D)


def decoder_layer_forward(lp, x, enc_x2, Ss, tgt_mask3, cross_mask3, n_head):
    B, St, D = x.shape
    x2 = x.reshape(B * St, D)

    # masked self-attention sublayer
    pa = lp["self_attn"]
    q, k, v = multi_proj_pallas(
        x2, [(pa["q"]["w"], pa["q"]["b"]),
             (pa["k"]["w"], pa["k"]["b"]),
             (pa["v"]["w"], pa["v"]["b"])], out_dtype=jnp.bfloat16)
    o = attention_pallas(q.reshape(B, St, D), k.reshape(B, St, D),
                         v.reshape(B, St, D), tgt_mask3, n_head)
    x2 = linear_add_ln_pallas(o.reshape(B * St, D), pa["o"]["w"], pa["o"]["b"],
                              x2, lp["norm1"]["g"], lp["norm1"]["b"])

    # cross-attention sublayer
    pc = lp["cross_attn"]
    (q,) = multi_proj_pallas(x2, [(pc["q"]["w"], pc["q"]["b"])],
                             out_dtype=jnp.bfloat16)
    k, v = multi_proj_pallas(enc_x2, [(pc["k"]["w"], pc["k"]["b"]),
                                      (pc["v"]["w"], pc["v"]["b"])],
                             out_dtype=jnp.bfloat16)
    o = attention_pallas(q.reshape(B, St, D), k.reshape(B, Ss, D),
                         v.reshape(B, Ss, D), cross_mask3, n_head)
    x2 = linear_add_ln_pallas(o.reshape(B * St, D), pc["o"]["w"], pc["o"]["b"],
                              x2, lp["norm2"]["g"], lp["norm2"]["b"])

    # FFN sublayer
    x2 = ffn_add_ln_pallas(x2, lp["ffn1"]["w"], lp["ffn1"]["b"],
                           lp["ffn2"]["w"], lp["ffn2"]["b"],
                           lp["norm3"]["g"], lp["norm3"]["b"])
    return x2.reshape(B, St, D)


def encoder_forward(params, src, src_pad_row, n_head):
    B, S = src.shape
    x = params["enc_emb"][src] + params["pe"][:S][None, :, :]   # embedding + PE (glue)
    enc_mask = jnp.broadcast_to(src_pad_row[:, None, :], (B, S, S)).astype(jnp.float32)
    for lp in params["enc_layers"]:
        x = encoder_layer_forward(lp, x, enc_mask, n_head)
    return x


def decoder_forward(params, tgt, enc_src, src_pad_row, tgt_mask3, n_head):
    B, St = tgt.shape
    Ss = enc_src.shape[1]
    D = enc_src.shape[2]
    x = params["dec_emb"][tgt] + params["pe"][:St][None, :, :]
    cross_mask = jnp.broadcast_to(src_pad_row[:, None, :], (B, St, Ss)).astype(jnp.float32)
    enc_x2 = enc_src.reshape(B * Ss, D)
    for lp in params["dec_layers"]:
        x = decoder_layer_forward(lp, x, enc_x2, Ss, tgt_mask3, cross_mask, n_head)
    logits = linear_pallas(x.reshape(B * St, D),
                           params["out_proj"]["w"], params["out_proj"]["b"])
    return logits.reshape(B, St, -1)


def transformer_forward(params, src, tgt, *, src_pad_idx, tgt_pad_idx, n_head):
    # same semantics as make_src_mask / make_tgt_mask, but kept per-batch (no head dup)
    src_pad_row = (src != src_pad_idx)                                   # (B, Ss) keys
    tgt_len = tgt.shape[1]
    tgt_pad = (tgt != tgt_pad_idx)[:, :, None]                           # (B, St, 1) query rows
    tril = jnp.tril(jnp.ones((tgt_len, tgt_len), dtype=bool))            # (St, St)
    tgt_mask3 = (tgt_pad & tril[None, :, :]).astype(jnp.float32)         # (B, St, St)

    enc_src = encoder_forward(params, src, src_pad_row, n_head)
    return decoder_forward(params, tgt, enc_src, src_pad_row, tgt_mask3, n_head)


# ------------------------------------- main -------------------------------------

if __name__ == "__main__":
    # small config consistent with the module's constructor
    vocab_size = 32
    d_model = 32
    max_len = 16
    dropout = 0.0          # eval-mode (identity)
    base = 10000
    n_head = 4
    ffn_hidden = 64
    n_layers = 2
    src_pad_idx = 1
    tgt_pad_idx = 1
    tgt_sos_idx = 2

    B, S_src, S_tgt = 2, 8, 8

    key = jax.random.PRNGKey(0)
    k_params, k_src, k_tgt = jax.random.split(key, 3)

    params = init_transformer(k_params, vocab_size, d_model, max_len,
                              base, ffn_hidden, n_layers)

    src = jax.random.randint(k_src, (B, S_src), 2, vocab_size, dtype=jnp.int32)
    tgt = jax.random.randint(k_tgt, (B, S_tgt), 2, vocab_size, dtype=jnp.int32)
    # sprinkle some pad tokens so the masks are exercised
    src = src.at[:, -2:].set(src_pad_idx)
    tgt = tgt.at[:, 0].set(tgt_sos_idx).at[:, -1:].set(tgt_pad_idx)

    fwd = jax.jit(lambda p, s, t: transformer_forward(
        p, s, t, src_pad_idx=src_pad_idx, tgt_pad_idx=tgt_pad_idx, n_head=n_head))

    out = fwd(params, src, tgt)
    out = jax.block_until_ready(out)

    assert out.shape == (B, S_tgt, vocab_size), out.shape
    assert bool(jnp.all(jnp.isfinite(out)))
    print("KERNEL_OK")
</pallas_src>

<mosaic_0001>
module attributes {stable_mosaic.version = 11 : i64} {
  func.func @kernel(%arg0: i32, %arg1: memref<16x32xf32, #tpu.memory_space<vmem>>, %arg2: memref<32x32xf32, #tpu.memory_space<vmem>>, %arg3: memref<1x32xf32, #tpu.memory_space<vmem>>, %arg4: memref<32x32xf32, #tpu.memory_space<vmem>>, %arg5: memref<1x32xf32, #tpu.memory_space<vmem>>, %arg6: memref<32x32xf32, #tpu.memory_space<vmem>>, %arg7: memref<1x32xf32, #tpu.memory_space<vmem>>, %arg8: memref<16x32xbf16, #tpu.memory_space<vmem>>, %arg9: memref<16x32xbf16, #tpu.memory_space<vmem>>, %arg10: memref<16x32xbf16, #tpu.memory_space<vmem>>) attributes {dimension_semantics = [#tpu.dimension_semantics<parallel>], iteration_bounds = array<i64: 1>, scalar_prefetch = 0 : i64, scratch_operands = 0 : i64, tpu.core_type = #tpu.core_type<tc>, window_params = [{transform_indices = @transform_0, window_bounds = array<i64: 16, 32>}, {pipeline_mode = #tpu.pipeline_mode<synchronous>, transform_indices = @transform_1, window_bounds = array<i64: 32, 32>}, {pipeline_mode = #tpu.pipeline_mode<synchronous>, transform_indices = @transform_2, window_bounds = array<i64: 1, 32>}, {pipeline_mode = #tpu.pipeline_mode<synchronous>, transform_indices = @transform_3, window_bounds = array<i64: 32, 32>}, {pipeline_mode = #tpu.pipeline_mode<synchronous>, transform_indices = @transform_4, window_bounds = array<i64: 1, 32>}, {pipeline_mode = #tpu.pipeline_mode<synchronous>, transform_indices = @transform_5, window_bounds = array<i64: 32, 32>}, {pipeline_mode = #tpu.pipeline_mode<synchronous>, transform_indices = @transform_6, window_bounds = array<i64: 1, 32>}, {transform_indices = @transform_7, window_bounds = array<i64: 16, 32>}, {transform_indices = @transform_8, window_bounds = array<i64: 16, 32>}, {transform_indices = @transform_9, window_bounds = array<i64: 16, 32>}]} {
    %c0 = arith.constant 0 : index
    %c0_0 = arith.constant 0 : index
    %0 = vector.load %arg1[%c0, %c0_0] : memref<16x32xf32, #tpu.memory_space<vmem>>, vector<16x32xf32>
    %1 = arith.truncf %0 : vector<16x32xf32> to vector<16x32xbf16>
    %c0_1 = arith.constant 0 : index
    %c0_2 = arith.constant 0 : index
    %2 = vector.load %arg2[%c0_1, %c0_2] : memref<32x32xf32, #tpu.memory_space<vmem>>, vector<32x32xf32>
    %3 = arith.truncf %2 : vector<32x32xf32> to vector<32x32xbf16>
    %cst = arith.constant dense<0.000000e+00> : vector<16x32xf32>
    %4 = tpu.matmul %1, %3, %cst {dimension_numbers = #tpu.dot_dimension_numbers<[1], [0], [0], [1], [0, 0, 1, 1], [], []>} : vector<16x32xbf16>, vector<32x32xbf16>, vector<16x32xf32> -> vector<16x32xf32>
    %c0_3 = arith.constant 0 : index
    %c0_4 = arith.constant 0 : index
    %5 = vector.load %arg3[%c0_3, %c0_4] : memref<1x32xf32, #tpu.memory_space<vmem>>, vector<1x32xf32>
    %6 = vector.broadcast %5 : vector<1x32xf32> to vector<16x32xf32>
    %7 = arith.addf %4, %6 : vector<16x32xf32>
    %8 = arith.truncf %7 : vector<16x32xf32> to vector<16x32xbf16>
    %c0_5 = arith.constant 0 : index
    %c0_6 = arith.constant 0 : index
    %9 = vector.load %arg8[%c0_5, %c0_6] : memref<16x32xbf16, #tpu.memory_space<vmem>>, vector<16x32xbf16>
    tpu.vector_store %arg8[%c0_5, %c0_6], %8 {strides = array<i32>} : memref<16x32xbf16, #tpu.memory_space<vmem>>, vector<16x32xbf16>,
    %c0_7 = arith.constant 0 : index
    %c0_8 = arith.constant 0 : index
    %10 = vector.load %arg4[%c0_7, %c0_8] : memref<32x32xf32, #tpu.memory_space<vmem>>, vector<32x32xf32>
    %11 = arith.truncf %10 : vector<32x32xf32> to vector<32x32xbf16>
    %cst_9 = arith.constant dense<0.000000e+00> : vector<16x32xf32>
    %12 = tpu.matmul %1, %11, %cst_9 {dimension_numbers = #tpu.dot_dimension_numbers<[1], [0], [0], [1], [0, 0, 1, 1], [], []>} : vector<16x32xbf16>, vector<32x32xbf16>, vector<16x32xf32> -> vector<16x32xf32>
    %c0_10 = arith.constant 0 : index
    %c0_11 = arith.constant 0 : index
    %13 = vector.load %arg5[%c0_10, %c0_11] : memref<1x32xf32, #tpu.memory_space<vmem>>, vector<1x32xf32>
    %14 = vector.broadcast %13 : vector<1x32xf32> to vector<16x32xf32>
    %15 = arith.addf %12, %14 : vector<16x32xf32>
    %16 = arith.truncf %15 : vector<16x32xf32> to vector<16x32xbf16>
    %c0_12 = arith.constant 0 : index
    %c0_13 = arith.constant 0 : index
    %17 = vector.load %arg9[%c0_12, %c0_13] : memref<16x32xbf16, #tpu.memory_space<vmem>>, vector<16x32xbf16>
    tpu.vector_store %arg9[%c0_12, %c0_13], %16 {strides = array<i32>} : memref<16x32xbf16, #tpu.memory_space<vmem>>, vector<16x32xbf16>,
    %c0_14 = arith.constant 0 : index
    %c0_15 = arith.constant 0 : index
    %18 = vector.load %arg6[%c0_14, %c0_15] : memref<32x32xf32, #tpu.memory_space<vmem>>, vector<32x32xf32>
    %19 = arith.truncf %18 : vector<32x32xf32> to vector<32x32xbf16>
    %cst_16 = arith.constant dense<0.000000e+00> : vector<16x32xf32>
    %20 = tpu.matmul %1, %19, %cst_16 {dimension_numbers = #tpu.dot_dimension_numbers<[1], [0], [0], [1], [0, 0, 1, 1], [], []>} : vector<16x32xbf16>, vector<32x32xbf16>, vector<16x32xf32> -> vector<16x32xf32>
    %c0_17 = arith.constant 0 : index
    %c0_18 = arith.constant 0 : index
    %21 = vector.load %arg7[%c0_17, %c0_18] : memref<1x32xf32, #tpu.memory_space<vmem>>, vector<1x32xf32>
    %22 = vector.broadcast %21 : vector<1x32xf32> to vector<16x32xf32>
    %23 = arith.addf %20, %22 : vector<16x32xf32>
    %24 = arith.truncf %23 : vector<16x32xf32> to vector<16x32xbf16>
    %c0_19 = arith.constant 0 : index
    %c0_20 = arith.constant 0 : index
    %25 = vector.load %arg10[%c0_19, %c0_20] : memref<16x32xbf16, #tpu.memory_space<vmem>>, vector<16x32xbf16>
    tpu.vector_store %arg10[%c0_19, %c0_20], %24 {strides = array<i32>} : memref<16x32xbf16, #tpu.memory_space<vmem>>, vector<16x32xbf16>,
    return
  }
  func.func @transform_0(%arg0: i32) -> (i32, i32) {
    %c0_i32 = arith.constant 0 : i32
    %c0_i32_0 = arith.constant 0 : i32
    return %arg0, %c0_i32 : i32, i32
  }
  func.func @transform_1(%arg0: i32) -> (i32, i32) {
    %c0_i32 = arith.constant 0 : i32
    %c0_i32_0 = arith.constant 0 : i32
    %c0_i32_1 = arith.constant 0 : i32
    return %c0_i32, %c0_i32_0 : i32, i32
  }
  func.func @transform_2(%arg0: i32) -> (i32, i32) {
    %c0_i32 = arith.constant 0 : i32
    %c0_i32_0 = arith.constant 0 : i32
    %c0_i32_1 = arith.constant 0 : i32
    return %c0_i32, %c0_i32_0 : i32, i32
  }
  func.func @transform_3(%arg0: i32) -> (i32, i32) {
    %c0_i32 = arith.constant 0 : i32
    %c0_i32_0 = arith.constant 0 : i32
    %c0_i32_1 = arith.constant 0 : i32
    return %c0_i32, %c0_i32_0 : i32, i32
  }
  func.func @transform_4(%arg0: i32) -> (i32, i32) {
    %c0_i32 = arith.constant 0 : i32
    %c0_i32_0 = arith.constant 0 : i32
    %c0_i32_1 = arith.constant 0 : i32
    return %c0_i32, %c0_i32_0 : i32, i32
  }
  func.func @transform_5(%arg0: i32) -> (i32, i32) {
    %c0_i32 = arith.constant 0 : i32
    %c0_i32_0 = arith.constant 0 : i32
    %c0_i32_1 = arith.constant 0 : i32
    return %c0_i32, %c0_i32_0 : i32, i32
  }
  func.func @transform_6(%arg0: i32) -> (i32, i32) {
    %c0_i32 = arith.constant 0 : i32
    %c0_i32_0 = arith.constant 0 : i32
    %c0_i32_1 = arith.constant 0 : i32
    return %c0_i32, %c0_i32_0 : i32, i32
  }
  func.func @transform_7(%arg0: i32) -> (i32, i32) {
    %c0_i32 = arith.constant 0 : i32
    %c0_i32_0 = arith.constant 0 : i32
    return %arg0, %c0_i32 : i32, i32
  }
  func.func @transform_8(%arg0: i32) -> (i32, i32) {
    %c0_i32 = arith.constant 0 : i32
    %c0_i32_0 = arith.constant 0 : i32
    return %arg0, %c0_i32 : i32, i32
  }
  func.func @transform_9(%arg0: i32) -> (i32, i32) {
    %c0_i32 = arith.constant 0 : i32
    %c0_i32_0 = arith.constant 0 : i32
    return %arg0, %c0_i32 : i32, i32
  }
}

module attributes {stable_mosaic.version = 11 : i64} {
  func.func @kernel(%arg0: i32, %arg1: memref<1x8x32xbf16, #tpu.memory_space<vmem>>, %arg2: memref<1x8x32xbf16, #tpu.memory_space<vmem>>, %arg3: memref<1x8x32xbf16, #tpu.memory_space<vmem>>, %arg4: memref<1x8x8xf32, #tpu.memory_space<vmem>>, %arg5: memref<1x8x32xf32, #tpu.memory_space<vmem>>) attributes {dimension_semantics = [#tpu.dimension_semantics<parallel>], iteration_bounds = array<i64: 2>, scalar_prefetch = 0 : i64, scratch_operands = 0 : i64, tpu.core_type = #tpu.core_type<tc>, window_params = [{transform_indices = @transform_0, window_bounds = array<i64: 1, 8, 32>}, {transform_indices = @transform_1, window_bounds = array<i64: 1, 8, 32>}, {transform_indices = @transform_2, window_bounds = array<i64: 1, 8, 32>}, {transform_indices = @transform_3, window_bounds = array<i64: 1, 8, 8>}, {transform_indices = @transform_4, window_bounds = array<i64: 1, 8, 32>}]} {
    %c0 = arith.constant 0 : index
    %c0_0 = arith.constant 0 : index
    %c0_1 = arith.constant 0 : index
    %0 = vector.load %arg1[%c0, %c0_0, %c0_1] : memref<1x8x32xbf16, #tpu.memory_space<vmem>>, vector<1x8x32xbf16>
    %1 = vector.shape_cast %0 : vector<1x8x32xbf16> to vector<8x32xbf16>
    %c0_2 = arith.constant 0 : index
    %c0_3 = arith.constant 0 : index
    %c0_4 = arith.constant 0 : index
    %2 = vector.load %arg2[%c0_2, %c0_3, %c0_4] : memref<1x8x32xbf16, #tpu.memory_space<vmem>>, vector<1x8x32xbf16>
    %3 = vector.shape_cast %2 : vector<1x8x32xbf16> to vector<8x32xbf16>
    %c0_5 = arith.constant 0 : index
    %c0_6 = arith.constant 0 : index
    %c0_7 = arith.constant 0 : index
    %4 = vector.load %arg3[%c0_5, %c0_6, %c0_7] : memref<1x8x32xbf16, #tpu.memory_space<vmem>>, vector<1x8x32xbf16>
    %5 = vector.shape_cast %4 : vector<1x8x32xbf16> to vector<8x32xbf16>
    %c0_8 = arith.constant 0 : index
    %c0_9 = arith.constant 0 : index
    %c0_10 = arith.constant 0 : index
    %6 = vector.load %arg4[%c0_8, %c0_9, %c0_10] : memref<1x8x8xf32, #tpu.memory_space<vmem>>, vector<1x8x8xf32>
    %7 = vector.shape_cast %6 : vector<1x8x8xf32> to vector<8x8xf32>
    %8 = vector.extract_strided_slice %1 {offsets = [0, 0], sizes = [8, 8], strides = [1, 1]} : vector<8x32xbf16> to vector<8x8xbf16>
    %9 = vector.extract_strided_slice %3 {offsets = [0, 0], sizes = [8, 8], strides = [1, 1]} : vector<8x32xbf16> to vector<8x8xbf16>
    %10 = vector.extract_strided_slice %5 {offsets = [0, 0], sizes = [8, 8], strides = [1, 1]} : vector<8x32xbf16> to vector<8x8xbf16>
    %cst = arith.constant dense<0.000000e+00> : vector<8x8xf32>
    %11 = tpu.matmul %8, %9, %cst {dimension_numbers = #tpu.dot_dimension_numbers<[1], [1], [0], [0], [0, 0, 1, 0], [], []>} : vector<8x8xbf16>, vector<8x8xbf16>, vector<8x8xf32> -> vector<8x8xf32>
    %cst_11 = arith.constant 0.353553385 : f32
    %12 = vector.broadcast %cst_11 : f32 to vector<8x8xf32>
    %13 = arith.mulf %11, %12 : vector<8x8xf32>
    %cst_12 = arith.constant 0.000000e+00 : f32
    %14 = vector.broadcast %cst_12 : f32 to vector<8x8xf32>
    %15 = arith.cmpf ogt, %7, %14 : vector<8x8xf32>
    %cst_13 = arith.constant -1.000000e+09 : f32
    %16 = vector.broadcast %cst_13 : f32 to vector<8x8xf32>
    %17 = arith.select %15, %13, %16 : vector<8x8xi1>, vector<8x8xf32>
    %cst_14 = arith.constant dense<0xFF800000> : vector<8xf32>
    %18 = vector.multi_reduction <maximumf>, %17, %cst_14 [1] : vector<8x8xf32> to vector<8xf32>
    %19 = vector.shape_cast %18 : vector<8xf32> to vector<8x1xf32>
    %20 = vector.broadcast %19 : vector<8x1xf32> to vector<8x8xf32>
    %21 = arith.subf %17, %20 : vector<8x8xf32>
    %22 = math.exp %21 : vector<8x8xf32>
    %cst_15 = arith.constant dense<0.000000e+00> : vector<8xf32>
    %23 = vector.multi_reduction <add>, %22, %cst_15 [1] : vector<8x8xf32> to vector<8xf32>
    %24 = vector.shape_cast %23 : vector<8xf32> to vector<8x1xf32>
    %25 = tpu.reciprocal %24 {approx = true} : vector<8x1xf32> -> vector<8x1xf32>
    %26 = vector.broadcast %25 : vector<8x1xf32> to vector<8x8xf32>
    %27 = arith.mulf %22, %26 : vector<8x8xf32>
    %28 = arith.truncf %27 : vector<8x8xf32> to vector<8x8xbf16>
    %cst_16 = arith.constant dense<0.000000e+00> : vector<8x8xf32>
    %29 = tpu.matmul %28, %10, %cst_16 {dimension_numbers = #tpu.dot_dimension_numbers<[1], [0], [0], [1], [0, 0, 1, 1], [], []>} : vector<8x8xbf16>, vector<8x8xbf16>, vector<8x8xf32> -> vector<8x8xf32>
    %30 = vector.extract_strided_slice %1 {offsets = [0, 8], sizes = [8, 8], strides = [1, 1]} : vector<8x32xbf16> to vector<8x8xbf16>
    %31 = vector.extract_strided_slice %3 {offsets = [0, 8], sizes = [8, 8], strides = [1, 1]} : vector<8x32xbf16> to vector<8x8xbf16>
    %32 = vector.extract_strided_slice %5 {offsets = [0, 8], sizes = [8, 8], strides = [1, 1]} : vector<8x32xbf16> to vector<8x8xbf16>
    %cst_17 = arith.constant dense<0.000000e+00> : vector<8x8xf32>
    %33 = tpu.matmul %30, %31, %cst_17 {dimension_numbers = #tpu.dot_dimension_numbers<[1], [1], [0], [0], [0, 0, 1, 0], [], []>} : vector<8x8xbf16>, vector<8x8xbf16>, vector<8x8xf32> -> vector<8x8xf32>
    %cst_18 = arith.constant 0.353553385 : f32
    %34 = vector.broadcast %cst_18 : f32 to vector<8x8xf32>
    %35 = arith.mulf %33, %34 : vector<8x8xf32>
    %cst_19 = arith.constant 0.000000e+00 : f32
    %36 = vector.broadcast %cst_19 : f32 to vector<8x8xf32>
    %37 = arith.cmpf ogt, %7, %36 : vector<8x8xf32>
    %cst_20 = arith.constant -1.000000e+09 : f32
    %38 = vector.broadcast %cst_20 : f32 to vector<8x8xf32>
    %39 = arith.select %37, %35, %38 : vector<8x8xi1>, vector<8x8xf32>
    %cst_21 = arith.constant dense<0xFF800000> : vector<8xf32>
    %40 = vector.multi_reduction <maximumf>, %39, %cst_21 [1] : vector<8x8xf32> to vector<8xf32>
    %41 = vector.shape_cast %40 : vector<8xf32> to vector<8x1xf32>
    %42 = vector.broadcast %41 : vector<8x1xf32> to vector<8x8xf32>
    %43 = arith.subf %39, %42 : vector<8x8xf32>
    %44 = math.exp %43 : vector<8x8xf32>
    %cst_22 = arith.constant dense<0.000000e+00> : vector<8xf32>
    %45 = vector.multi_reduction <add>, %44, %cst_22 [1] : vector<8x8xf32> to vector<8xf32>
    %46 = vector.shape_cast %45 : vector<8xf32> to vector<8x1xf32>
    %47 = tpu.reciprocal %46 {approx = true} : vector<8x1xf32> -> vector<8x1xf32>
    %48 = vector.broadcast %47 : vector<8x1xf32> to vector<8x8xf32>
    %49 = arith.mulf %44, %48 : vector<8x8xf32>
    %50 = arith.truncf %49 : vector<8x8xf32> to vector<8x8xbf16>
    %cst_23 = arith.constant dense<0.000000e+00> : vector<8x8xf32>
    %51 = tpu.matmul %50, %32, %cst_23 {dimension_numbers = #tpu.dot_dimension_numbers<[1], [0], [0], [1], [0, 0, 1, 1], [], []>} : vector<8x8xbf16>, vector<8x8xbf16>, vector<8x8xf32> -> vector<8x8xf32>
    %52 = vector.extract_strided_slice %1 {offsets = [0, 16], sizes = [8, 8], strides = [1, 1]} : vector<8x32xbf16> to vector<8x8xbf16>
    %53 = vector.extract_strided_slice %3 {offsets = [0, 16], sizes = [8, 8], strides = [1, 1]} : vector<8x32xbf16> to vector<8x8xbf16>
    %54 = vector.extract_strided_slice %5 {offsets = [0, 16], sizes = [8, 8], strides = [1, 1]} : vector<8x32xbf16> to vector<8x8xbf16>
    %cst_24 = arith.constant dense<0.000000e+00> : vector<8x8xf32>
    %55 = tpu.matmul %52, %53, %cst_24 {dimension_numbers = #tpu.dot_dimension_numbers<[1], [1], [0], [0], [0, 0, 1, 0], [], []>} : vector<8x8xbf16>, vector<8x8xbf16>, vector<8x8xf32> -> vector<8x8xf32>
    %cst_25 = arith.constant 0.353553385 : f32
    %56 = vector.broadcast %cst_25 : f32 to vector<8x8xf32>
    %57 = arith.mulf %55, %56 : vector<8x8xf32>
    %cst_26 = arith.constant 0.000000e+00 : f32
    %58 = vector.broadcast %cst_26 : f32 to vector<8x8xf32>
    %59 = arith.cmpf ogt, %7, %58 : vector<8x8xf32>
    %cst_27 = arith.constant -1.000000e+09 : f32
    %60 = vector.broadcast %cst_27 : f32 to vector<8x8xf32>
    %61 = arith.select %59, %57, %60 : vector<8x8xi1>, vector<8x8xf32>
    %cst_28 = arith.constant dense<0xFF800000> : vector<8xf32>
    %62 = vector.multi_reduction <maximumf>, %61, %cst_28 [1] : vector<8x8xf32> to vector<8xf32>
    %63 = vector.shape_cast %62 : vector<8xf32> to vector<8x1xf32>
    %64 = vector.broadcast %63 : vector<8x1xf32> to vector<8x8xf32>
    %65 = arith.subf %61, %64 : vector<8x8xf32>
    %66 = math.exp %65 : vector<8x8xf32>
    %cst_29 = arith.constant dense<0.000000e+00> : vector<8xf32>
    %67 = vector.multi_reduction <add>, %66, %cst_29 [1] : vector<8x8xf32> to vector<8xf32>
    %68 = vector.shape_cast %67 : vector<8xf32> to vector<8x1xf32>
    %69 = tpu.reciprocal %68 {approx = true} : vector<8x1xf32> -> vector<8x1xf32>
    %70 = vector.broadcast %69 : vector<8x1xf32> to vector<8x8xf32>
    %71 = arith.mulf %66, %70 : vector<8x8xf32>
    %72 = arith.truncf %71 : vector<8x8xf32> to vector<8x8xbf16>
    %cst_30 = arith.constant dense<0.000000e+00> : vector<8x8xf32>
    %73 = tpu.matmul %72, %54, %cst_30 {dimension_numbers = #tpu.dot_dimension_numbers<[1], [0], [0], [1], [0, 0, 1, 1], [], []>} : vector<8x8xbf16>, vector<8x8xbf16>, vector<8x8xf32> -> vector<8x8xf32>
    %74 = vector.extract_strided_slice %1 {offsets = [0, 24], sizes = [8, 8], strides = [1, 1]} : vector<8x32xbf16> to vector<8x8xbf16>
    %75 = vector.extract_strided_slice %3 {offsets = [0, 24], sizes = [8, 8], strides = [1, 1]} : vector<8x32xbf16> to vector<8x8xbf16>
    %76 = vector.extract_strided_slice %5 {offsets = [0, 24], sizes = [8, 8], strides = [1, 1]} : vector<8x32xbf16> to vector<8x8xbf16>
    %cst_31 = arith.constant dense<0.000000e+00> : vector<8x8xf32>
    %77 = tpu.matmul %74, %75, %cst_31 {dimension_numbers = #tpu.dot_dimension_numbers<[1], [1], [0], [0], [0, 0, 1, 0], [], []>} : vector<8x8xbf16>, vector<8x8xbf16>, vector<8x8xf32> -> vector<8x8xf32>
    %cst_32 = arith.constant 0.353553385 : f32
    %78 = vector.broadcast %cst_32 : f32 to vector<8x8xf32>
    %79 = arith.mulf %77, %78 : vector<8x8xf32>
    %cst_33 = arith.constant 0.000000e+00 : f32
    %80 = vector.broadcast %cst_33 : f32 to vector<8x8xf32>
    %81 = arith.cmpf ogt, %7, %80 : vector<8x8xf32>
    %cst_34 = arith.constant -1.000000e+09 : f32
    %82 = vector.broadcast %cst_34 : f32 to vector<8x8xf32>
    %83 = arith.select %81, %79, %82 : vector<8x8xi1>, vector<8x8xf32>
    %cst_35 = arith.constant dense<0xFF800000> : vector<8xf32>
    %84 = vector.multi_reduction <maximumf>, %83, %cst_35 [1] : vector<8x8xf32> to vector<8xf32>
    %85 = vector.shape_cast %84 : vector<8xf32> to vector<8x1xf32>
    %86 = vector.broadcast %85 : vector<8x1xf32> to vector<8x8xf32>
    %87 = arith.subf %83, %86 : vector<8x8xf32>
    %88 = math.exp %87 : vector<8x8xf32>
    %cst_36 = arith.constant dense<0.000000e+00> : vector<8xf32>
    %89 = vector.multi_reduction <add>, %88, %cst_36 [1] : vector<8x8xf32> to vector<8xf32>
    %90 = vector.shape_cast %89 : vector<8xf32> to vector<8x1xf32>
    %91 = tpu.reciprocal %90 {approx = true} : vector<8x1xf32> -> vector<8x1xf32>
    %92 = vector.broadcast %91 : vector<8x1xf32> to vector<8x8xf32>
    %93 = arith.mulf %88, %92 : vector<8x8xf32>
    %94 = arith.truncf %93 : vector<8x8xf32> to vector<8x8xbf16>
    %cst_37 = arith.constant dense<0.000000e+00> : vector<8x8xf32>
    %95 = tpu.matmul %94, %76, %cst_37 {dimension_numbers = #tpu.dot_dimension_numbers<[1], [0], [0], [1], [0, 0, 1, 1], [], []>} : vector<8x8xbf16>, vector<8x8xbf16>, vector<8x8xf32> -> vector<8x8xf32>
    %96 = tpu.concatenate %29, %51, %73, %95 in 1 : vector<8x8xf32>, vector<8x8xf32>, vector<8x8xf32>, vector<8x8xf32> -> vector<8x32xf32>
    %c0_38 = arith.constant 0 : index
    %c0_39 = arith.constant 0 : index
    %c0_40 = arith.constant 0 : index
    %97 = vector.load %arg5[%c0_38, %c0_39, %c0_40] : memref<1x8x32xf32, #tpu.memory_space<vmem>>, vector<1x8x32xf32>
    %98 = vector.shape_cast %97 : vector<1x8x32xf32> to vector<8x32xf32>
    %99 = vector.shape_cast %96 : vector<8x32xf32> to vector<1x8x32xf32>
    tpu.vector_store %arg5[%c0_38, %c0_39, %c0_40], %99 {strides = array<i32>} : memref<1x8x32xf32, #tpu.memory_space<vmem>>, vector<1x8x32xf32>,
    return
  }
  func.func @transform_0(%arg0: i32) -> (i32, i32, i32) {
    %c0_i32 = arith.constant 0 : i32
    %c0_i32_0 = arith.constant 0 : i32
    %c0_i32_1 = arith.constant 0 : i32
    return %arg0, %c0_i32, %c0_i32_0 : i32, i32, i32
  }
  func.func @transform_1(%arg0: i32) -> (i32, i32, i32) {
    %c0_i32 = arith.constant 0 : i32
    %c0_i32_0 = arith.constant 0 : i32
    %c0_i32_1 = arith.constant 0 : i32
    return %arg0, %c0_i32, %c0_i32_0 : i32, i32, i32
  }
  func.func @transform_2(%arg0: i32) -> (i32, i32, i32) {
    %c0_i32 = arith.constant 0 : i32
    %c0_i32_0 = arith.constant 0 : i32
    %c0_i32_1 = arith.constant 0 : i32
    return %arg0, %c0_i32, %c0_i32_0 : i32, i32, i32
  }
  func.func @transform_3(%arg0: i32) -> (i32, i32, i32) {
    %c0_i32 = arith.constant 0 : i32
    %c0_i32_0 = arith.constant 0 : i32
    %c0_i32_1 = arith.constant 0 : i32
    return %arg0, %c0_i32, %c0_i32_0 : i32, i32, i32
  }
  func.func @transform_4(%arg0: i32) -> (i32, i32, i32) {
    %c0_i32 = arith.constant 0 : i32
    %c0_i32_0 = arith.constant 0 : i32
    %c0_i32_1 = arith.constant 0 : i32
    return %arg0, %c0_i32, %c0_i32_0 : i32, i32, i32
  }
}

module attributes {stable_mosaic.version = 11 : i64} {
  func.func @_linear_add_ln_kernel(%arg0: i32, %arg1: memref<16x32xf32, #tpu.memory_space<vmem>>, %arg2: memref<32x32xf32, #tpu.memory_space<vmem>>, %arg3: memref<1x32xf32, #tpu.memory_space<vmem>>, %arg4: memref<16x32xf32, #tpu.memory_space<vmem>>, %arg5: memref<1x32xf32, #tpu.memory_space<vmem>>, %arg6: memref<1x32xf32, #tpu.memory_space<vmem>>, %arg7: memref<16x32xf32, #tpu.memory_space<vmem>>) attributes {dimension_semantics = [#tpu.dimension_semantics<parallel>], iteration_bounds = array<i64: 1>, scalar_prefetch = 0 : i64, scratch_operands = 0 : i64, tpu.core_type = #tpu.core_type<tc>, window_params = [{transform_indices = @transform_0, window_bounds = array<i64: 16, 32>}, {pipeline_mode = #tpu.pipeline_mode<synchronous>, transform_indices = @transform_1, window_bounds = array<i64: 32, 32>}, {pipeline_mode = #tpu.pipeline_mode<synchronous>, transform_indices = @transform_2, window_bounds = array<i64: 1, 32>}, {transform_indices = @transform_3, window_bounds = array<i64: 16, 32>}, {pipeline_mode = #tpu.pipeline_mode<synchronous>, transform_indices = @transform_4, window_bounds = array<i64: 1, 32>}, {pipeline_mode = #tpu.pipeline_mode<synchronous>, transform_indices = @transform_5, window_bounds = array<i64: 1, 32>}, {transform_indices = @transform_6, window_bounds = array<i64: 16, 32>}]} {
    %c0 = arith.constant 0 : index
    %c0_0 = arith.constant 0 : index
    %0 = vector.load %arg1[%c0, %c0_0] : memref<16x32xf32, #tpu.memory_space<vmem>>, vector<16x32xf32>
    %1 = arith.truncf %0 : vector<16x32xf32> to vector<16x32xbf16>
    %c0_1 = arith.constant 0 : index
    %c0_2 = arith.constant 0 : index
    %2 = vector.load %arg2[%c0_1, %c0_2] : memref<32x32xf32, #tpu.memory_space<vmem>>, vector<32x32xf32>
    %3 = arith.truncf %2 : vector<32x32xf32> to vector<32x32xbf16>
    %cst = arith.constant dense<0.000000e+00> : vector<16x32xf32>
    %4 = tpu.matmul %1, %3, %cst {dimension_numbers = #tpu.dot_dimension_numbers<[1], [0], [0], [1], [0, 0, 1, 1], [], []>} : vector<16x32xbf16>, vector<32x32xbf16>, vector<16x32xf32> -> vector<16x32xf32>
    %c0_3 = arith.constant 0 : index
    %c0_4 = arith.constant 0 : index
    %5 = vector.load %arg3[%c0_3, %c0_4] : memref<1x32xf32, #tpu.memory_space<vmem>>, vector<1x32xf32>
    %6 = vector.broadcast %5 : vector<1x32xf32> to vector<16x32xf32>
    %7 = arith.addf %4, %6 : vector<16x32xf32>
    %c0_5 = arith.constant 0 : index
    %c0_6 = arith.constant 0 : index
    %8 = vector.load %arg4[%c0_5, %c0_6] : memref<16x32xf32, #tpu.memory_space<vmem>>, vector<16x32xf32>
    %9 = arith.addf %7, %8 : vector<16x32xf32>
    %cst_7 = arith.constant dense<0.000000e+00> : vector<16xf32>
    %10 = vector.multi_reduction <add>, %9, %cst_7 [1] : vector<16x32xf32> to vector<16xf32>
    %11 = vector.shape_cast %10 : vector<16xf32> to vector<16x1xf32>
    %cst_8 = arith.constant 3.200000e+01 : f32
    %12 = vector.broadcast %cst_8 : f32 to vector<16x1xf32>
    %13 = arith.divf %11, %12 : vector<16x1xf32>
    %14 = vector.broadcast %13 : vector<16x1xf32> to vector<16x32xf32>
    %15 = arith.subf %9, %14 : vector<16x32xf32>
    %16 = arith.mulf %15, %15 : vector<16x32xf32>
    %cst_9 = arith.constant dense<0.000000e+00> : vector<16xf32>
    %17 = vector.multi_reduction <add>, %16, %cst_9 [1] : vector<16x32xf32> to vector<16xf32>
    %18 = vector.shape_cast %17 : vector<16xf32> to vector<16x1xf32>
    %cst_10 = arith.constant 3.200000e+01 : f32
    %19 = vector.broadcast %cst_10 : f32 to vector<16x1xf32>
    %20 = arith.divf %18, %19 : vector<16x1xf32>
    %21 = vector.broadcast %13 : vector<16x1xf32> to vector<16x32xf32>
    %22 = arith.subf %9, %21 : vector<16x32xf32>
    %cst_11 = arith.constant 9.99999974E-6 : f32
    %23 = vector.broadcast %cst_11 : f32 to vector<16x1xf32>
    %24 = arith.addf %20, %23 : vector<16x1xf32>
    %25 = math.rsqrt %24 : vector<16x1xf32>
    %26 = vector.broadcast %25 : vector<16x1xf32> to vector<16x32xf32>
    %27 = arith.mulf %22, %26 : vector<16x32xf32>
    %c0_12 = arith.constant 0 : index
    %c0_13 = arith.constant 0 : index
    %28 = vector.load %arg5[%c0_12, %c0_13] : memref<1x32xf32, #tpu.memory_space<vmem>>, vector<1x32xf32>
    %29 = vector.broadcast %28 : vector<1x32xf32> to vector<16x32xf32>
    %30 = arith.mulf %27, %29 : vector<16x32xf32>
    %c0_14 = arith.constant 0 : index
    %c0_15 = arith.constant 0 : index
    %31 = vector.load %arg6[%c0_14, %c0_15] : memref<1x32xf32, #tpu.memory_space<vmem>>, vector<1x32xf32>
    %32 = vector.broadcast %31 : vector<1x32xf32> to vector<16x32xf32>
    %33 = arith.addf %30, %32 : vector<16x32xf32>
    %c0_16 = arith.constant 0 : index
    %c0_17 = arith.constant 0 : index
    %34 = vector.load %arg7[%c0_16, %c0_17] : memref<16x32xf32, #tpu.memory_space<vmem>>, vector<16x32xf32>
    tpu.vector_store %arg7[%c0_16, %c0_17], %33 {strides = array<i32>} : memref<16x32xf32, #tpu.memory_space<vmem>>, vector<16x32xf32>,
    return
  }
  func.func @transform_0(%arg0: i32) -> (i32, i32) {
    %c0_i32 = arith.constant 0 : i32
    %c0_i32_0 = arith.constant 0 : i32
    return %arg0, %c0_i32 : i32, i32
  }
  func.func @transform_1(%arg0: i32) -> (i32, i32) {
    %c0_i32 = arith.constant 0 : i32
    %c0_i32_0 = arith.constant 0 : i32
    %c0_i32_1 = arith.constant 0 : i32
    return %c0_i32, %c0_i32_0 : i32, i32
  }
  func.func @transform_2(%arg0: i32) -> (i32, i32) {
    %c0_i32 = arith.constant 0 : i32
    %c0_i32_0 = arith.constant 0 : i32
    %c0_i32_1 = arith.constant 0 : i32
    return %c0_i32, %c0_i32_0 : i32, i32
  }
  func.func @transform_3(%arg0: i32) -> (i32, i32) {
    %c0_i32 = arith.constant 0 : i32
    %c0_i32_0 = arith.constant 0 : i32
    return %arg0, %c0_i32 : i32, i32
  }
  func.func @transform_4(%arg0: i32) -> (i32, i32) {
    %c0_i32 = arith.constant 0 : i32
    %c0_i32_0 = arith.constant 0 : i32
    %c0_i32_1 = arith.constant 0 : i32
    return %c0_i32, %c0_i32_0 : i32, i32
  }
  func.func @transform_5(%arg0: i32) -> (i32, i32) {
    %c0_i32 = arith.constant 0 : i32
    %c0_i32_0 = arith.constant 0 : i32
    %c0_i32_1 = arith.constant 0 : i32
    return %c0_i32, %c0_i32_0 : i32, i32
  }
  func.func @transform_6(%arg0: i32) -> (i32, i32) {
    %c0_i32 = arith.constant 0 : i32
    %c0_i32_0 = arith.constant 0 : i32
    return %arg0, %c0_i32 : i32, i32
  }
}

module attributes {stable_mosaic.version = 11 : i64} {
  func.func @_ffn_add_ln_kernel(%arg0: i32, %arg1: memref<16x32xf32, #tpu.memory_space<vmem>>, %arg2: memref<32x64xf32, #tpu.memory_space<vmem>>, %arg3: memref<1x64xf32, #tpu.memory_space<vmem>>, %arg4: memref<64x32xf32, #tpu.memory_space<vmem>>, %arg5: memref<1x32xf32, #tpu.memory_space<vmem>>, %arg6: memref<1x32xf32, #tpu.memory_space<vmem>>, %arg7: memref<1x32xf32, #tpu.memory_space<vmem>>, %arg8: memref<16x32xf32, #tpu.memory_space<vmem>>) attributes {dimension_semantics = [#tpu.dimension_semantics<parallel>], iteration_bounds = array<i64: 1>, scalar_prefetch = 0 : i64, scratch_operands = 0 : i64, tpu.core_type = #tpu.core_type<tc>, window_params = [{transform_indices = @transform_0, window_bounds = array<i64: 16, 32>}, {pipeline_mode = #tpu.pipeline_mode<synchronous>, transform_indices = @transform_1, window_bounds = array<i64: 32, 64>}, {pipeline_mode = #tpu.pipeline_mode<synchronous>, transform_indices = @transform_2, window_bounds = array<i64: 1, 64>}, {pipeline_mode = #tpu.pipeline_mode<synchronous>, transform_indices = @transform_3, window_bounds = array<i64: 64, 32>}, {pipeline_mode = #tpu.pipeline_mode<synchronous>, transform_indices = @transform_4, window_bounds = array<i64: 1, 32>}, {pipeline_mode = #tpu.pipeline_mode<synchronous>, transform_indices = @transform_5, window_bounds = array<i64: 1, 32>}, {pipeline_mode = #tpu.pipeline_mode<synchronous>, transform_indices = @transform_6, window_bounds = array<i64: 1, 32>}, {transform_indices = @transform_7, window_bounds = array<i64: 16, 32>}]} {
    %c0 = arith.constant 0 : index
    %c0_0 = arith.constant 0 : index
    %0 = vector.load %arg1[%c0, %c0_0] : memref<16x32xf32, #tpu.memory_space<vmem>>, vector<16x32xf32>
    %1 = arith.truncf %0 : vector<16x32xf32> to vector<16x32xbf16>
    %c0_1 = arith.constant 0 : index
    %c0_2 = arith.constant 0 : index
    %2 = vector.load %arg2[%c0_1, %c0_2] : memref<32x64xf32, #tpu.memory_space<vmem>>, vector<32x64xf32>
    %3 = arith.truncf %2 : vector<32x64xf32> to vector<32x64xbf16>
    %cst = arith.constant dense<0.000000e+00> : vector<16x64xf32>
    %4 = tpu.matmul %1, %3, %cst {dimension_numbers = #tpu.dot_dimension_numbers<[1], [0], [0], [1], [0, 0, 1, 1], [], []>} : vector<16x32xbf16>, vector<32x64xbf16>, vector<16x64xf32> -> vector<16x64xf32>
    %c0_3 = arith.constant 0 : index
    %c0_4 = arith.constant 0 : index
    %5 = vector.load %arg3[%c0_3, %c0_4] : memref<1x64xf32, #tpu.memory_space<vmem>>, vector<1x64xf32>
    %6 = vector.broadcast %5 : vector<1x64xf32> to vector<16x64xf32>
    %7 = arith.addf %4, %6 : vector<16x64xf32>
    %cst_5 = arith.constant 0.000000e+00 : f32
    %8 = vector.broadcast %cst_5 : f32 to vector<16x64xf32>
    %9 = arith.maximumf %7, %8 : vector<16x64xf32>
    %10 = arith.truncf %9 : vector<16x64xf32> to vector<16x64xbf16>
    %c0_6 = arith.constant 0 : index
    %c0_7 = arith.constant 0 : index
    %11 = vector.load %arg4[%c0_6, %c0_7] : memref<64x32xf32, #tpu.memory_space<vmem>>, vector<64x32xf32>
    %12 = arith.truncf %11 : vector<64x32xf32> to vector<64x32xbf16>
    %cst_8 = arith.constant dense<0.000000e+00> : vector<16x32xf32>
    %13 = tpu.matmul %10, %12, %cst_8 {dimension_numbers = #tpu.dot_dimension_numbers<[1], [0], [0], [1], [0, 0, 1, 1], [], []>} : vector<16x64xbf16>, vector<64x32xbf16>, vector<16x32xf32> -> vector<16x32xf32>
    %c0_9 = arith.constant 0 : index
    %c0_10 = arith.constant 0 : index
    %14 = vector.load %arg5[%c0_9, %c0_10] : memref<1x32xf32, #tpu.memory_space<vmem>>, vector<1x32xf32>
    %15 = vector.broadcast %14 : vector<1x32xf32> to vector<16x32xf32>
    %16 = arith.addf %13, %15 : vector<16x32xf32>
    %17 = arith.addf %16, %0 : vector<16x32xf32>
    %cst_11 = arith.constant dense<0.000000e+00> : vector<16xf32>
    %18 = vector.multi_reduction <add>, %17, %cst_11 [1] : vector<16x32xf32> to vector<16xf32>
    %19 = vector.shape_cast %18 : vector<16xf32> to vector<16x1xf32>
    %cst_12 = arith.constant 3.200000e+01 : f32
    %20 = vector.broadcast %cst_12 : f32 to vector<16x1xf32>
    %21 = arith.divf %19, %20 : vector<16x1xf32>
    %22 = vector.broadcast %21 : vector<16x1xf32> to vector<16x32xf32>
    %23 = arith.subf %17, %22 : vector<16x32xf32>
    %24 = arith.mulf %23, %23 : vector<16x32xf32>
    %cst_13 = arith.constant dense<0.000000e+00> : vector<16xf32>
    %25 = vector.multi_reduction <add>, %24, %cst_13 [1] : vector<16x32xf32> to vector<16xf32>
    %26 = vector.shape_cast %25 : vector<16xf32> to vector<16x1xf32>
    %cst_14 = arith.constant 3.200000e+01 : f32
    %27 = vector.broadcast %cst_14 : f32 to vector<16x1xf32>
    %28 = arith.divf %26, %27 : vector<16x1xf32>
    %29 = vector.broadcast %21 : vector<16x1xf32> to vector<16x32xf32>
    %30 = arith.subf %17, %29 : vector<16x32xf32>
    %cst_15 = arith.constant 9.99999974E-6 : f32
    %31 = vector.broadcast %cst_15 : f32 to vector<16x1xf32>
    %32 = arith.addf %28, %31 : vector<16x1xf32>
    %33 = math.rsqrt %32 : vector<16x1xf32>
    %34 = vector.broadcast %33 : vector<16x1xf32> to vector<16x32xf32>
    %35 = arith.mulf %30, %34 : vector<16x32xf32>
    %c0_16 = arith.constant 0 : index
    %c0_17 = arith.constant 0 : index
    %36 = vector.load %arg6[%c0_16, %c0_17] : memref<1x32xf32, #tpu.memory_space<vmem>>, vector<1x32xf32>
    %37 = vector.broadcast %36 : vector<1x32xf32> to vector<16x32xf32>
    %38 = arith.mulf %35, %37 : vector<16x32xf32>
    %c0_18 = arith.constant 0 : index
    %c0_19 = arith.constant 0 : index
    %39 = vector.load %arg7[%c0_18, %c0_19] : memref<1x32xf32, #tpu.memory_space<vmem>>, vector<1x32xf32>
    %40 = vector.broadcast %39 : vector<1x32xf32> to vector<16x32xf32>
    %41 = arith.addf %38, %40 : vector<16x32xf32>
    %c0_20 = arith.constant 0 : index
    %c0_21 = arith.constant 0 : index
    %42 = vector.load %arg8[%c0_20, %c0_21] : memref<16x32xf32, #tpu.memory_space<vmem>>, vector<16x32xf32>
    tpu.vector_store %arg8[%c0_20, %c0_21], %41 {strides = array<i32>} : memref<16x32xf32, #tpu.memory_space<vmem>>, vector<16x32xf32>,
    return
  }
  func.func @transform_0(%arg0: i32) -> (i32, i32) {
    %c0_i32 = arith.constant 0 : i32
    %c0_i32_0 = arith.constant 0 : i32
    return %arg0, %c0_i32 : i32, i32
  }
  func.func @transform_1(%arg0: i32) -> (i32, i32) {
    %c0_i32 = arith.constant 0 : i32
    %c0_i32_0 = arith.constant 0 : i32
    %c0_i32_1 = arith.constant 0 : i32
    return %c0_i32, %c0_i32_0 : i32, i32
  }
  func.func @transform_2(%arg0: i32) -> (i32, i32) {
    %c0_i32 = arith.constant 0 : i32
    %c0_i32_0 = arith.constant 0 : i32
    %c0_i32_1 = arith.constant 0 : i32
    return %c0_i32, %c0_i32_0 : i32, i32
  }
  func.func @transform_3(%arg0: i32) -> (i32, i32) {
    %c0_i32 = arith.constant 0 : i32
    %c0_i32_0 = arith.constant 0 : i32
    %c0_i32_1 = arith.constant 0 : i32
    return %c0_i32, %c0_i32_0 : i32, i32
  }
  func.func @transform_4(%arg0: i32) -> (i32, i32) {
    %c0_i32 = arith.constant 0 : i32
    %c0_i32_0 = arith.constant 0 : i32
    %c0_i32_1 = arith.constant 0 : i32
    return %c0_i32, %c0_i32_0 : i32, i32
  }
  func.func @transform_5(%arg0: i32) -> (i32, i32) {
    %c0_i32 = arith.constant 0 : i32
    %c0_i32_0 = arith.constant 0 : i32
    %c0_i32_1 = arith.constant 0 : i32
    return %c0_i32, %c0_i32_0 : i32, i32
  }
  func.func @transform_6(%arg0: i32) -> (i32, i32) {
    %c0_i32 = arith.constant 0 : i32
    %c0_i32_0 = arith.constant 0 : i32
    %c0_i32_1 = arith.constant 0 : i32
    return %c0_i32, %c0_i32_0 : i32, i32
  }
  func.func @transform_7(%arg0: i32) -> (i32, i32) {
    %c0_i32 = arith.constant 0 : i32
    %c0_i32_0 = arith.constant 0 : i32
    return %arg0, %c0_i32 : i32, i32
  }
}

module attributes {stable_mosaic.version = 11 : i64} {
  func.func @kernel(%arg0: i32, %arg1: memref<16x32xf32, #tpu.memory_space<vmem>>, %arg2: memref<32x32xf32, #tpu.memory_space<vmem>>, %arg3: memref<1x32xf32, #tpu.memory_space<vmem>>, %arg4: memref<32x32xf32, #tpu.memory_space<vmem>>, %arg5: memref<1x32xf32, #tpu.memory_space<vmem>>, %arg6: memref<16x32xbf16, #tpu.memory_space<vmem>>, %arg7: memref<16x32xbf16, #tpu.memory_space<vmem>>) attributes {dimension_semantics = [#tpu.dimension_semantics<parallel>], iteration_bounds = array<i64: 1>, scalar_prefetch = 0 : i64, scratch_operands = 0 : i64, tpu.core_type = #tpu.core_type<tc>, window_params = [{transform_indices = @transform_0, window_bounds = array<i64: 16, 32>}, {pipeline_mode = #tpu.pipeline_mode<synchronous>, transform_indices = @transform_1, window_bounds = array<i64: 32, 32>}, {pipeline_mode = #tpu.pipeline_mode<synchronous>, transform_indices = @transform_2, window_bounds = array<i64: 1, 32>}, {pipeline_mode = #tpu.pipeline_mode<synchronous>, transform_indices = @transform_3, window_bounds = array<i64: 32, 32>}, {pipeline_mode = #tpu.pipeline_mode<synchronous>, transform_indices = @transform_4, window_bounds = array<i64: 1, 32>}, {transform_indices = @transform_5, window_bounds = array<i64: 16, 32>}, {transform_indices = @transform_6, window_bounds = array<i64: 16, 32>}]} {
    %c0 = arith.constant 0 : index
    %c0_0 = arith.constant 0 : index
    %0 = vector.load %arg1[%c0, %c0_0] : memref<16x32xf32, #tpu.memory_space<vmem>>, vector<16x32xf32>
    %1 = arith.truncf %0 : vector<16x32xf32> to vector<16x32xbf16>
    %c0_1 = arith.constant 0 : index
    %c0_2 = arith.constant 0 : index
    %2 = vector.load %arg2[%c0_1, %c0_2] : memref<32x32xf32, #tpu.memory_space<vmem>>, vector<32x32xf32>
    %3 = arith.truncf %2 : vector<32x32xf32> to vector<32x32xbf16>
    %cst = arith.constant dense<0.000000e+00> : vector<16x32xf32>
    %4 = tpu.matmul %1, %3, %cst {dimension_numbers = #tpu.dot_dimension_numbers<[1], [0], [0], [1], [0, 0, 1, 1], [], []>} : vector<16x32xbf16>, vector<32x32xbf16>, vector<16x32xf32> -> vector<16x32xf32>
    %c0_3 = arith.constant 0 : index
    %c0_4 = arith.constant 0 : index
    %5 = vector.load %arg3[%c0_3, %c0_4] : memref<1x32xf32, #tpu.memory_space<vmem>>, vector<1x32xf32>
    %6 = vector.broadcast %5 : vector<1x32xf32> to vector<16x32xf32>
    %7 = arith.addf %4, %6 : vector<16x32xf32>
    %8 = arith.truncf %7 : vector<16x32xf32> to vector<16x32xbf16>
    %c0_5 = arith.constant 0 : index
    %c0_6 = arith.constant 0 : index
    %9 = vector.load %arg6[%c0_5, %c0_6] : memref<16x32xbf16, #tpu.memory_space<vmem>>, vector<16x32xbf16>
    tpu.vector_store %arg6[%c0_5, %c0_6], %8 {strides = array<i32>} : memref<16x32xbf16, #tpu.memory_space<vmem>>, vector<16x32xbf16>,
    %c0_7 = arith.constant 0 : index
    %c0_8 = arith.constant 0 : index
    %10 = vector.load %arg4[%c0_7, %c0_8] : memref<32x32xf32, #tpu.memory_space<vmem>>, vector<32x32xf32>
    %11 = arith.truncf %10 : vector<32x32xf32> to vector<32x32xbf16>
    %cst_9 = arith.constant dense<0.000000e+00> : vector<16x32xf32>
    %12 = tpu.matmul %1, %11, %cst_9 {dimension_numbers = #tpu.dot_dimension_numbers<[1], [0], [0], [1], [0, 0, 1, 1], [], []>} : vector<16x32xbf16>, vector<32x32xbf16>, vector<16x32xf32> -> vector<16x32xf32>
    %c0_10 = arith.constant 0 : index
    %c0_11 = arith.constant 0 : index
    %13 = vector.load %arg5[%c0_10, %c0_11] : memref<1x32xf32, #tpu.memory_space<vmem>>, vector<1x32xf32>
    %14 = vector.broadcast %13 : vector<1x32xf32> to vector<16x32xf32>
    %15 = arith.addf %12, %14 : vector<16x32xf32>
    %16 = arith.truncf %15 : vector<16x32xf32> to vector<16x32xbf16>
    %c0_12 = arith.constant 0 : index
    %c0_13 = arith.constant 0 : index
    %17 = vector.load %arg7[%c0_12, %c0_13] : memref<16x32xbf16, #tpu.memory_space<vmem>>, vector<16x32xbf16>
    tpu.vector_store %arg7[%c0_12, %c0_13], %16 {strides = array<i32>} : memref<16x32xbf16, #tpu.memory_space<vmem>>, vector<16x32xbf16>,
    return
  }
  func.func @transform_0(%arg0: i32) -> (i32, i32) {
    %c0_i32 = arith.constant 0 : i32
    %c0_i32_0 = arith.constant 0 : i32
    return %arg0, %c0_i32 : i32, i32
  }
  func.func @transform_1(%arg0: i32) -> (i32, i32) {
    %c0_i32 = arith.constant 0 : i32
    %c0_i32_0 = arith.constant 0 : i32
    %c0_i32_1 = arith.constant 0 : i32
    return %c0_i32, %c0_i32_0 : i32, i32
  }
  func.func @transform_2(%arg0: i32) -> (i32, i32) {
    %c0_i32 = arith.constant 0 : i32
    %c0_i32_0 = arith.constant 0 : i32
    %c0_i32_1 = arith.constant 0 : i32
    return %c0_i32, %c0_i32_0 : i32, i32
  }
  func.func @transform_3(%arg0: i32) -> (i32, i32) {
    %c0_i32 = arith.constant 0 : i32
    %c0_i32_0 = arith.constant 0 : i32
    %c0_i32_1 = arith.constant 0 : i32
    return %c0_i32, %c0_i32_0 : i32, i32
  }
  func.func @transform_4(%arg0: i32) -> (i32, i32) {
    %c0_i32 = arith.constant 0 : i32
    %c0_i32_0 = arith.constant 0 : i32
    %c0_i32_1 = arith.constant 0 : i32
    return %c0_i32, %c0_i32_0 : i32, i32
  }
  func.func @transform_5(%arg0: i32) -> (i32, i32) {
    %c0_i32 = arith.constant 0 : i32
    %c0_i32_0 = arith.constant 0 : i32
    return %arg0, %c0_i32 : i32, i32
  }
  func.func @transform_6(%arg0: i32) -> (i32, i32) {
    %c0_i32 = arith.constant 0 : i32
    %c0_i32_0 = arith.constant 0 : i32
    return %arg0, %c0_i32 : i32, i32
  }
}

module attributes {stable_mosaic.version = 11 : i64} {
  func.func @kernel(%arg0: i32, %arg1: memref<16x32xf32, #tpu.memory_space<vmem>>, %arg2: memref<32x32xf32, #tpu.memory_space<vmem>>, %arg3: memref<1x32xf32, #tpu.memory_space<vmem>>, %arg4: memref<16x32xbf16, #tpu.memory_space<vmem>>) attributes {dimension_semantics = [#tpu.dimension_semantics<parallel>], iteration_bounds = array<i64: 1>, scalar_prefetch = 0 : i64, scratch_operands = 0 : i64, tpu.core_type = #tpu.core_type<tc>, window_params = [{transform_indices = @transform_0, window_bounds = array<i64: 16, 32>}, {pipeline_mode = #tpu.pipeline_mode<synchronous>, transform_indices = @transform_1, window_bounds = array<i64: 32, 32>}, {pipeline_mode = #tpu.pipeline_mode<synchronous>, transform_indices = @transform_2, window_bounds = array<i64: 1, 32>}, {transform_indices = @transform_3, window_bounds = array<i64: 16, 32>}]} {
    %c0 = arith.constant 0 : index
    %c0_0 = arith.constant 0 : index
    %0 = vector.load %arg1[%c0, %c0_0] : memref<16x32xf32, #tpu.memory_space<vmem>>, vector<16x32xf32>
    %1 = arith.truncf %0 : vector<16x32xf32> to vector<16x32xbf16>
    %c0_1 = arith.constant 0 : index
    %c0_2 = arith.constant 0 : index
    %2 = vector.load %arg2[%c0_1, %c0_2] : memref<32x32xf32, #tpu.memory_space<vmem>>, vector<32x32xf32>
    %3 = arith.truncf %2 : vector<32x32xf32> to vector<32x32xbf16>
    %cst = arith.constant dense<0.000000e+00> : vector<16x32xf32>
    %4 = tpu.matmul %1, %3, %cst {dimension_numbers = #tpu.dot_dimension_numbers<[1], [0], [0], [1], [0, 0, 1, 1], [], []>} : vector<16x32xbf16>, vector<32x32xbf16>, vector<16x32xf32> -> vector<16x32xf32>
    %c0_3 = arith.constant 0 : index
    %c0_4 = arith.constant 0 : index
    %5 = vector.load %arg3[%c0_3, %c0_4] : memref<1x32xf32, #tpu.memory_space<vmem>>, vector<1x32xf32>
    %6 = vector.broadcast %5 : vector<1x32xf32> to vector<16x32xf32>
    %7 = arith.addf %4, %6 : vector<16x32xf32>
    %8 = arith.truncf %7 : vector<16x32xf32> to vector<16x32xbf16>
    %c0_5 = arith.constant 0 : index
    %c0_6 = arith.constant 0 : index
    %9 = vector.load %arg4[%c0_5, %c0_6] : memref<16x32xbf16, #tpu.memory_space<vmem>>, vector<16x32xbf16>
    tpu.vector_store %arg4[%c0_5, %c0_6], %8 {strides = array<i32>} : memref<16x32xbf16, #tpu.memory_space<vmem>>, vector<16x32xbf16>,
    return
  }
  func.func @transform_0(%arg0: i32) -> (i32, i32) {
    %c0_i32 = arith.constant 0 : i32
    %c0_i32_0 = arith.constant 0 : i32
    return %arg0, %c0_i32 : i32, i32
  }
  func.func @transform_1(%arg0: i32) -> (i32, i32) {
    %c0_i32 = arith.constant 0 : i32
    %c0_i32_0 = arith.constant 0 : i32
    %c0_i32_1 = arith.constant 0 : i32
    return %c0_i32, %c0_i32_0 : i32, i32
  }
  func.func @transform_2(%arg0: i32) -> (i32, i32) {
    %c0_i32 = arith.constant 0 : i32
    %c0_i32_0 = arith.constant 0 : i32
    %c0_i32_1 = arith.constant 0 : i32
    return %c0_i32, %c0_i32_0 : i32, i32
  }
  func.func @transform_3(%arg0: i32) -> (i32, i32) {
    %c0_i32 = arith.constant 0 : i32
    %c0_i32_0 = arith.constant 0 : i32
    return %arg0, %c0_i32 : i32, i32
  }
}

module attributes {stable_mosaic.version = 11 : i64} {
  func.func @_linear_kernel(%arg0: i32, %arg1: i32, %arg2: memref<16x32xf32, #tpu.memory_space<vmem>>, %arg3: memref<32x32xf32, #tpu.memory_space<vmem>>, %arg4: memref<1x32xf32, #tpu.memory_space<vmem>>, %arg5: memref<16x32xf32, #tpu.memory_space<vmem>>) attributes {dimension_semantics = [#tpu.dimension_semantics<parallel>, #tpu.dimension_semantics<parallel>], iteration_bounds = array<i64: 1, 1>, scalar_prefetch = 0 : i64, scratch_operands = 0 : i64, tpu.core_type = #tpu.core_type<tc>, window_params = [{transform_indices = @transform_0, window_bounds = array<i64: 16, 32>}, {transform_indices = @transform_1, window_bounds = array<i64: 32, 32>}, {transform_indices = @transform_2, window_bounds = array<i64: 1, 32>}, {transform_indices = @transform_3, window_bounds = array<i64: 16, 32>}]} {
    %c0 = arith.constant 0 : index
    %c0_0 = arith.constant 0 : index
    %0 = vector.load %arg2[%c0, %c0_0] : memref<16x32xf32, #tpu.memory_space<vmem>>, vector<16x32xf32>
    %1 = arith.truncf %0 : vector<16x32xf32> to vector<16x32xbf16>
    %c0_1 = arith.constant 0 : index
    %c0_2 = arith.constant 0 : index
    %2 = vector.load %arg3[%c0_1, %c0_2] : memref<32x32xf32, #tpu.memory_space<vmem>>, vector<32x32xf32>
    %3 = arith.truncf %2 : vector<32x32xf32> to vector<32x32xbf16>
    %cst = arith.constant dense<0.000000e+00> : vector<16x32xf32>
    %4 = tpu.matmul %1, %3, %cst {dimension_numbers = #tpu.dot_dimension_numbers<[1], [0], [0], [1], [0, 0, 1, 1], [], []>} : vector<16x32xbf16>, vector<32x32xbf16>, vector<16x32xf32> -> vector<16x32xf32>
    %c0_3 = arith.constant 0 : index
    %c0_4 = arith.constant 0 : index
    %5 = vector.load %arg4[%c0_3, %c0_4] : memref<1x32xf32, #tpu.memory_space<vmem>>, vector<1x32xf32>
    %6 = vector.broadcast %5 : vector<1x32xf32> to vector<16x32xf32>
    %7 = arith.addf %4, %6 : vector<16x32xf32>
    %c0_5 = arith.constant 0 : index
    %c0_6 = arith.constant 0 : index
    %8 = vector.load %arg5[%c0_5, %c0_6] : memref<16x32xf32, #tpu.memory_space<vmem>>, vector<16x32xf32>
    tpu.vector_store %arg5[%c0_5, %c0_6], %7 {strides = array<i32>} : memref<16x32xf32, #tpu.memory_space<vmem>>, vector<16x32xf32>,
    return
  }
  func.func @transform_0(%arg0: i32, %arg1: i32) -> (i32, i32) {
    %c0_i32 = arith.constant 0 : i32
    %c0_i32_0 = arith.constant 0 : i32
    return %arg0, %c0_i32 : i32, i32
  }
  func.func @transform_1(%arg0: i32, %arg1: i32) -> (i32, i32) {
    %c0_i32 = arith.constant 0 : i32
    %c0_i32_0 = arith.constant 0 : i32
    return %c0_i32, %arg1 : i32, i32
  }
  func.func @transform_2(%arg0: i32, %arg1: i32) -> (i32, i32) {
    %c0_i32 = arith.constant 0 : i32
    %c0_i32_0 = arith.constant 0 : i32
    return %c0_i32, %arg1 : i32, i32
  }
  func.func @transform_3(%arg0: i32, %arg1: i32) -> (i32, i32) {
    %c0_i32 = arith.constant 0 : i32
    return %arg0, %arg1 : i32, i32
  }
}

</mosaic_0001>

<llo_original>
// kernel: _lambda_.27
$region0: #{_lambda_.27}
  #allocation0 [shape = 'u32[]', space=smem, size = 0x4, offset = 0x4, fixed_abs, tag = 'smem constant byte address 0x4 - core index']
  #allocation1 [shape = 'u32[144,128]{1,0:T(1,128)}', space=vmem, size = 0x12000, scoped, tag = 'internal scratch']
  %s0 = inlined_call_operand.vmem [shape: f32[16,32], index: 0, kind: input, shape index: {}]
  %s1 = inlined_call_operand.vmem [shape: f32[32,32], index: 1, kind: input, shape index: {}]
  %s2 = inlined_call_operand.vmem [shape: f32[1,32], index: 2, kind: input, shape index: {}]
  %s3 = inlined_call_operand.vmem [shape: f32[16,32], index: 3, kind: input, shape index: {}]
  %s4 = inlined_call_operand.vmem [shape: f32[1,32], index: 4, kind: input, shape index: {}]
  %s5 = inlined_call_operand.vmem [shape: f32[1,32], index: 5, kind: input, shape index: {}]
  %s6 = inlined_call_operand.vmem [shape: f32[16,32], index: 6, kind: output, shape index: {}]
  %s7 = sld [smem:[#allocation0]]
  $region34: #{_lambda_.27} parent=0
    _
  %s9 = ssub.s32 1, %s7
  %s10 = scalar_select 0, %s9, %s7
  // Predicated region
  $region2: #{_lambda_.27} parent=0 // pred_check
    _
  $region3: #{_lambda_.27} parent=0 // pred_check_branch
    %12 = sbr.rel (0) target = $region5
  $region4: #{_lambda_.27} parent=0 // pred_region
    _
  $region5: #{_lambda_.27} parent=0 // pred_fallthru
    _
  // Predicated region
  $region6: #{_lambda_.27} parent=0 // pred_check
    _
  $region7: #{_lambda_.27} parent=0 // pred_check_branch
    %14 = sbr.rel (0) target = $region9
  $region8: #{_lambda_.27} parent=0 // pred_region
    _
  $region9: #{_lambda_.27} parent=0 // pred_fallthru
    _
  // Predicated region
  $region10: #{_lambda_.27} parent=0 // pred_check
    _
  $region11: #{_lambda_.27} parent=0 // pred_check_branch
    %16 = sbr.rel (0) target = $region13
  $region12: #{_lambda_.27} parent=0 // pred_region
    _
  $region13: #{_lambda_.27} parent=0 // pred_fallthru
    _
  // Predicated region
  $region14: #{_lambda_.27} parent=0 // pred_check
    _
  $region15: #{_lambda_.27} parent=0 // pred_check_branch
    %18 = sbr.rel (0) target = $region17
  $region16: #{_lambda_.27} parent=0 // pred_region
    _
  $region17: #{_lambda_.27} parent=0 // pred_fallthru
    _
  // Predicated region
  $region18: #{_lambda_.27} parent=0 // pred_check
    _
  $region19: #{_lambda_.27} parent=0 // pred_check_branch
    %20 = sbr.rel (0) target = $region21
  $region20: #{_lambda_.27} parent=0 // pred_region
    _
  $region21: #{_lambda_.27} parent=0 // pred_fallthru
    _
  // Predicated region
  $region22: #{_lambda_.27} parent=0 // pred_check
    _
  $region23: #{_lambda_.27} parent=0 // pred_check_branch
    %22 = sbr.rel (0) target = $region25
  $region24: #{_lambda_.27} parent=0 // pred_region
    _
  $region25: #{_lambda_.27} parent=0 // pred_fallthru
    _
  %v24 = vld [vmem:[%s0] sm:$0xff]
  %v25 = vld [vmem:[%s0 + $0x8] sm:$0xff]
  %v26 = vpack.c.bf16 %v25, %v24
  %v27 = vld [vmem:[%s1] sm:$0xff]
  %v28 = vld [vmem:[%s1 + $0x8] sm:$0xff]
  %v29 = vld [vmem:[%s1 + $0x10] sm:$0xff]
  %v30 = vld [vmem:[%s1 + $0x18] sm:$0xff]
  %v31 = vpack.c.bf16 %v28, %v27
  %v32 = vpack.c.bf16 %v30, %v29
  %v33 = vld [vmem:[%s2] sm:$0x1]
  %v35 = vlaneseq
  %v36 = vshrl.u32 %v35, 7
  %v37 = vsub.s32 0, %v36
  %v38 = vrot.slane %v33, %v37
  %vm40 = vcmask 261120
  %v42 = vsel %vm40, %v26, 0
  %44 = vmatprep.subr.bf16.mxu0 0
  %45 = vmatpush1.bf16.msra.mxu0 %v31
  %46 = vmatprep.subr.bf16.mxu0 0
  %47 = vmatpush1.bf16.msra.mxu0 %v32
  %48 = vmatprep.subr.bf16.mxu0 0
  %49 = vmatpush1.bf16.msra.mxu0 0
  %50 = vmatprep.subr.bf16.mxu0 0
  %51 = vmatpush1.bf16.msra.mxu0 0
  %52 = vmatprep.subr.bf16.mxu0 0
  %53 = vmatpush1.bf16.msra.mxu0 0
  %54 = vmatprep.subr.bf16.mxu0 0
  %55 = vmatpush1.bf16.msra.mxu0 0
  %56 = vmatprep.subr.bf16.mxu0 0
  %57 = vmatpush1.bf16.msra.mxu0 0
  %58 = vmatprep.subr.bf16.mxu0 0
  %59 = vmatpush1.bf16.msra.mxu0 0
  %60 = vmatprep.subr.bf16.mxu0 0
  %61 = vmatpush1.bf16.msra.mxu0 0
  %62 = vmatprep.subr.bf16.mxu0 0
  %63 = vmatpush1.bf16.msra.mxu0 0
  %64 = vmatprep.subr.bf16.mxu0 0
  %65 = vmatpush1.bf16.msra.mxu0 0
  %66 = vmatprep.subr.bf16.mxu0 0
  %67 = vmatpush1.bf16.msra.mxu0 0
  %68 = vmatprep.subr.bf16.mxu0 0
  %69 = vmatpush1.bf16.msra.mxu0 0
  %70 = vmatprep.subr.bf16.mxu0 0
  %71 = vmatpush1.bf16.msra.mxu0 0
  %72 = vmatprep.subr.bf16.mxu0 0
  %73 = vmatpush1.bf16.msra.mxu0 0
  %74 = vmatprep.subr.bf16.mxu0 0
  %75 = vmatpush1.bf16.msra.mxu0 0
  %76 = vmatprep.mubr.bf16.mxu0 0
  %77 = vmatmul.mubr.bf16.gmra.mrb[0].mxu0 %v42
  %v78 = vpop.f32.mrb[0].mxu0
  %v79 = vadd.f32 %v38, %v78
  %v80 = vpop.f32.mrb[0].mxu0
  %v81 = vpop.f32.mrb[0].mxu0
  %v82 = vadd.f32 %v38, %v81
  %v83 = vpop.f32.mrb[0].mxu0
  %84 = vdwg.mxu0
  %v85 = vld [vmem:[%s3] sm:$0xff]
  %v86 = vld [vmem:[%s3 + $0x8] sm:$0xff]
  %v87 = vadd.f32 %v79, %v85
  %v88 = vadd.f32 %v82, %v86
  %v89 = vsel %vm40, %v87, 0.0
  %90 = vadd.xlane.f32.xlu0 %v89
  %v91 = vpop.xlane.xlu0 %90
  %v92 = vsel %vm40, %v88, 0.0
  %93 = vadd.xlane.f32.xlu0 %v92
  %v94 = vpop.xlane.xlu0 %93
  %v95 = vrcp.pop 32.0
  %v96 = vmul.f32 %v91, %v95
  %v97 = vmul.f32 %v94, %v95
  %v98 = vsub.f32 %v87, %v96
  %v99 = vsub.f32 %v88, %v97
  %v100 = vmul.f32 %v98, %v98
  %v101 = vmul.f32 %v99, %v99
  %v102 = vsel %vm40, %v100, 0.0
  %103 = vadd.xlane.f32.xlu0 %v102
  %v104 = vpop.xlane.xlu0 %103
  %v105 = vsel %vm40, %v101, 0.0
  %106 = vadd.xlane.f32.xlu0 %v105
  %v107 = vpop.xlane.xlu0 %106
  %v108 = vmul.f32 %v104, %v95
  %v109 = vmul.f32 %v107, %v95
  %v110 = vadd.f32 %v108, 1e-05
  %v111 = vadd.f32 %v109, 1e-05
  %v112 = vrsqrt.pop %v110
  %v113 = vrsqrt.pop %v111
  %v114 = vmul.f32 %v98, %v112
  %v115 = vmul.f32 %v99, %v113
  %v116 = vld [vmem:[%s4] sm:$0x1]
  %v118 = vlaneseq
  %v119 = vshrl.u32 %v118, 7
  %v120 = vsub.s32 0, %v119
  %v121 = vrot.slane %v116, %v120
  %v123 = vmul.f32 %v114, %v121
  %v124 = vmul.f32 %v115, %v121
  %v125 = vld [vmem:[%s5] sm:$0x1]
  %v127 = vlaneseq
  %v128 = vshrl.u32 %v127, 7
  %v129 = vsub.s32 0, %v128
  %v130 = vrot.slane %v125, %v129
  %v132 = vadd.f32 %v123, %v130
  %v133 = vadd.f32 %v124, %v130
  %134 = vst.msk [vmem:[%s6] sm:$0xff] %vm40, %v132
  %135 = vst.msk [vmem:[%s6 + $0x8] sm:$0xff] %vm40, %v133
  // Predicated region
  $region26: #{_lambda_.27} parent=0 // pred_check
    _
  $region27: #{_lambda_.27} parent=0 // pred_check_branch
    %137 = sbr.rel (0) target = $region29
  $region28: #{_lambda_.27} parent=0 // pred_region
    _
  $region29: #{_lambda_.27} parent=0 // pred_fallthru
    _
  // Predicated region
  $region30: #{_lambda_.27} parent=0 // pred_check
    _
  $region31: #{_lambda_.27} parent=0 // pred_check_branch
    %139 = sbr.rel (0) target = $region33
  $region32: #{_lambda_.27} parent=0 // pred_region
    _
  $region33: #{_lambda_.27} parent=0 // pred_fallthru
    _

// kernel: _lambda_.25
$region0: #{_lambda_.25}
  #allocation0 [shape = 'u32[]', space=smem, size = 0x4, offset = 0x4, fixed_abs, tag = 'smem constant byte address 0x4 - core index']
  #allocation1 [shape = 'u32[144,128]{1,0:T(1,128)}', space=vmem, size = 0x12000, scoped, tag = 'internal scratch']
  %s0 = inlined_call_operand.vmem [shape: f32[16,32], index: 0, kind: input, shape index: {}]
  %s1 = inlined_call_operand.vmem [shape: f32[32,32], index: 1, kind: input, shape index: {}]
  %s2 = inlined_call_operand.vmem [shape: f32[1,32], index: 2, kind: input, shape index: {}]
  %s3 = inlined_call_operand.vmem [shape: f32[32,32], index: 3, kind: input, shape index: {}]
  %s4 = inlined_call_operand.vmem [shape: f32[1,32], index: 4, kind: input, shape index: {}]
  %s5 = inlined_call_operand.vmem [shape: f32[32,32], index: 5, kind: input, shape index: {}]
  %s6 = inlined_call_operand.vmem [shape: f32[1,32], index: 6, kind: input, shape index: {}]
  %s7 = inlined_call_operand.vmem [shape: bf16[16,32], index: 7, kind: output, shape index: {0}]
  %s8 = inlined_call_operand.vmem [shape: bf16[16,32], index: 8, kind: output, shape index: {1}]
  %s9 = inlined_call_operand.vmem [shape: bf16[16,32], index: 9, kind: output, shape index: {2}]
  %10 = xla_tuple %s7, %s8, %s9
  %s11 = sld [smem:[#allocation0]]
  $region54: #{_lambda_.25} parent=0
    _
  %s13 = ssub.s32 1, %s11
  %s14 = scalar_select 0, %s13, %s11
  // Predicated region
  $region2: #{_lambda_.25} parent=0 // pred_check
    _
  $region3: #{_lambda_.25} parent=0 // pred_check_branch
    %16 = sbr.rel (0) target = $region5
  $region4: #{_lambda_.25} parent=0 // pred_region
    _
  $region5: #{_lambda_.25} parent=0 // pred_fallthru
    _
  // Predicated region
  $region6: #{_lambda_.25} parent=0 // pred_check
    _
  $region7: #{_lambda_.25} parent=0 // pred_check_branch
    %18 = sbr.rel (0) target = $region9
  $region8: #{_lambda_.25} parent=0 // pred_region
    _
  $region9: #{_lambda_.25} parent=0 // pred_fallthru
    _
  // Predicated region
  $region10: #{_lambda_.25} parent=0 // pred_check
    _
  $region11: #{_lambda_.25} parent=0 // pred_check_branch
    %20 = sbr.rel (0) target = $region13
  $region12: #{_lambda_.25} parent=0 // pred_region
    _
  $region13: #{_lambda_.25} parent=0 // pred_fallthru
    _
  // Predicated region
  $region14: #{_lambda_.25} parent=0 // pred_check
    _
  $region15: #{_lambda_.25} parent=0 // pred_check_branch
    %22 = sbr.rel (0) target = $region17
  $region16: #{_lambda_.25} parent=0 // pred_region
    _
  $region17: #{_lambda_.25} parent=0 // pred_fallthru
    _
  // Predicated region
  $region18: #{_lambda_.25} parent=0 // pred_check
    _
  $region19: #{_lambda_.25} parent=0 // pred_check_branch
    %24 = sbr.rel (0) target = $region21
  $region20: #{_lambda_.25} parent=0 // pred_region
    _
  $region21: #{_lambda_.25} parent=0 // pred_fallthru
    _
  // Predicated region
  $region22: #{_lambda_.25} parent=0 // pred_check
    _
  $region23: #{_lambda_.25} parent=0 // pred_check_branch
    %26 = sbr.rel (0) target = $region25
  $region24: #{_lambda_.25} parent=0 // pred_region
    _
  $region25: #{_lambda_.25} parent=0 // pred_fallthru
    _
  // Predicated region
  $region26: #{_lambda_.25} parent=0 // pred_check
    _
  $region27: #{_lambda_.25} parent=0 // pred_check_branch
    %28 = sbr.rel (0) target = $region29
  $region28: #{_lambda_.25} parent=0 // pred_region
    _
  $region29: #{_lambda_.25} parent=0 // pred_fallthru
    _
  %v30 = vld [vmem:[%s0] sm:$0xff]
  %v31 = vld [vmem:[%s0 + $0x8] sm:$0xff]
  %v32 = vpack.c.bf16 %v31, %v30
  %v33 = vld [vmem:[%s1] sm:$0xff]
  %v34 = vld [vmem:[%s1 + $0x8] sm:$0xff]
  %v35 = vld [vmem:[%s1 + $0x10] sm:$0xff]
  %v36 = vld [vmem:[%s1 + $0x18] sm:$0xff]
  %v37 = vpack.c.bf16 %v34, %v33
  %v38 = vpack.c.bf16 %v36, %v35
  %v39 = vld [vmem:[%s2] sm:$0x1]
  %v41 = vlaneseq
  %v42 = vshrl.u32 %v41, 7
  %v43 = vsub.s32 0, %v42
  %v44 = vrot.slane %v39, %v43
  %vm46 = vcmask 261120
  %v48 = vsel %vm46, %v32, 0
  %50 = vmatprep.subr.bf16.mxu0 0
  %51 = vmatpush1.bf16.msra.mxu0 %v37
  %52 = vmatprep.subr.bf16.mxu0 0
  %53 = vmatpush1.bf16.msra.mxu0 %v38
  %54 = vmatprep.subr.bf16.mxu0 0
  %55 = vmatpush1.bf16.msra.mxu0 0
  %56 = vmatprep.subr.bf16.mxu0 0
  %57 = vmatpush1.bf16.msra.mxu0 0
  %58 = vmatprep.subr.bf16.mxu0 0
  %59 = vmatpush1.bf16.msra.mxu0 0
  %60 = vmatprep.subr.bf16.mxu0 0
  %61 = vmatpush1.bf16.msra.mxu0 0
  %62 = vmatprep.subr.bf16.mxu0 0
  %63 = vmatpush1.bf16.msra.mxu0 0
  %64 = vmatprep.subr.bf16.mxu0 0
  %65 = vmatpush1.bf16.msra.mxu0 0
  %66 = vmatprep.subr.bf16.mxu0 0
  %67 = vmatpush1.bf16.msra.mxu0 0
  %68 = vmatprep.subr.bf16.mxu0 0
  %69 = vmatpush1.bf16.msra.mxu0 0
  %70 = vmatprep.subr.bf16.mxu0 0
  %71 = vmatpush1.bf16.msra.mxu0 0
  %72 = vmatprep.subr.bf16.mxu0 0
  %73 = vmatpush1.bf16.msra.mxu0 0
  %74 = vmatprep.subr.bf16.mxu0 0
  %75 = vmatpush1.bf16.msra.mxu0 0
  %76 = vmatprep.subr.bf16.mxu0 0
  %77 = vmatpush1.bf16.msra.mxu0 0
  %78 = vmatprep.subr.bf16.mxu0 0
  %79 = vmatpush1.bf16.msra.mxu0 0
  %80 = vmatprep.subr.bf16.mxu0 0
  %81 = vmatpush1.bf16.msra.mxu0 0
  %82 = vmatprep.mubr.bf16.mxu0 0
  %83 = vmatmul.mubr.bf16.gmra.mrb[0].mxu0 %v48
  %v84 = vpop.f32.mrb[0].mxu0
  %v85 = vadd.f32 %v44, %v84
  %v86 = vpop.f32.mrb[0].mxu0
  %v87 = vpop.f32.mrb[0].mxu0
  %v88 = vadd.f32 %v44, %v87
  %v89 = vpop.f32.mrb[0].mxu0
  %90 = vdwg.mxu0
  %v91 = vpack.c.bf16 %v88, %v85
  %v93 = vunpack.c.l.b16 %v91
  %v94 = vunpack.c.h.b16 %v91
  %v95 = vpack.c.b16 %v93, %v93
  %v96 = vpack.c.b16 %v94, %v94
  %vm99 = vcmask 257024
  %100 = vst.msk [vmem:[%s7] sm:$0xf] %vm99, %v95
  %101 = vst.msk [vmem:[%s7 + $0x4] sm:$0xf] %vm99, %v96
  %v102 = vld [vmem:[%s3] sm:$0xff]
  %v103 = vld [vmem:[%s3 + $0x8] sm:$0xff]
  %v104 = vld [vmem:[%s3 + $0x10] sm:$0xff]
  %v105 = vld [vmem:[%s3 + $0x18] sm:$0xff]
  %v106 = vpack.c.bf16 %v103, %v102
  %v107 = vpack.c.bf16 %v105, %v104
  %v108 = vld [vmem:[%s4] sm:$0x1]
  %v110 = vlaneseq
  %v111 = vshrl.u32 %v110, 7
  %v112 = vsub.s32 0, %v111
  %v113 = vrot.slane %v108, %v112
  %115 = vmatprep.subr.bf16.mxu0 0
  %116 = vmatpush1.bf16.msra.mxu0 %v106
  %117 = vmatprep.subr.bf16.mxu0 0
  %118 = vmatpush1.bf16.msra.mxu0 %v107
  %119 = vmatprep.subr.bf16.mxu0 0
  %120 = vmatpush1.bf16.msra.mxu0 0
  %121 = vmatprep.subr.bf16.mxu0 0
  %122 = vmatpush1.bf16.msra.mxu0 0
  %123 = vmatprep.subr.bf16.mxu0 0
  %124 = vmatpush1.bf16.msra.mxu0 0
  %125 = vmatprep.subr.bf16.mxu0 0
  %126 = vmatpush1.bf16.msra.mxu0 0
  %127 = vmatprep.subr.bf16.mxu0 0
  %128 = vmatpush1.bf16.msra.mxu0 0
  %129 = vmatprep.subr.bf16.mxu0 0
  %130 = vmatpush1.bf16.msra.mxu0 0
  %131 = vmatprep.subr.bf16.mxu0 0
  %132 = vmatpush1.bf16.msra.mxu0 0
  %133 = vmatprep.subr.bf16.mxu0 0
  %134 = vmatpush1.bf16.msra.mxu0 0
  %135 = vmatprep.subr.bf16.mxu0 0
  %136 = vmatpush1.bf16.msra.mxu0 0
  %137 = vmatprep.subr.bf16.mxu0 0
  %138 = vmatpush1.bf16.msra.mxu0 0
  %139 = vmatprep.subr.bf16.mxu0 0
  %140 = vmatpush1.bf16.msra.mxu0 0
  %141 = vmatprep.subr.bf16.mxu0 0
  %142 = vmatpush1.bf16.msra.mxu0 0
  %143 = vmatprep.subr.bf16.mxu0 0
  %144 = vmatpush1.bf16.msra.mxu0 0
  %145 = vmatprep.subr.bf16.mxu0 0
  %146 = vmatpush1.bf16.msra.mxu0 0
  %147 = vmatprep.mubr.bf16.mxu0 0
  %148 = vmatmul.mubr.bf16.gmra.mrb[0].mxu0 %v48
  %v149 = vpop.f32.mrb[0].mxu0
  %v150 = vadd.f32 %v113, %v149
  %v151 = vpop.f32.mrb[0].mxu0
  %v152 = vpop.f32.mrb[0].mxu0
  %v153 = vadd.f32 %v113, %v152
  %v154 = vpop.f32.mrb[0].mxu0
  %155 = vdwg.mxu0
  %v156 = vpack.c.bf16 %v153, %v150
  %v158 = vunpack.c.l.b16 %v156
  %v159 = vunpack.c.h.b16 %v156
  %v160 = vpack.c.b16 %v158, %v158
  %v161 = vpack.c.b16 %v159, %v159
  %164 = vst.msk [vmem:[%s8] sm:$0xf] %vm99, %v160
  %165 = vst.msk [vmem:[%s8 + $0x4] sm:$0xf] %vm99, %v161
  %v166 = vld [vmem:[%s5] sm:$0xff]
  %v167 = vld [vmem:[%s5 + $0x8] sm:$0xff]
  %v168 = vld [vmem:[%s5 + $0x10] sm:$0xff]
  %v169 = vld [vmem:[%s5 + $0x18] sm:$0xff]
  %v170 = vpack.c.bf16 %v167, %v166
  %v171 = vpack.c.bf16 %v169, %v168
  %v172 = vld [vmem:[%s6] sm:$0x1]
  %v174 = vlaneseq
  %v175 = vshrl.u32 %v174, 7
  %v176 = vsub.s32 0, %v175
  %v177 = vrot.slane %v172, %v176
  %179 = vmatprep.subr.bf16.mxu0 0
  %180 = vmatpush1.bf16.msra.mxu0 %v170
  %181 = vmatprep.subr.bf16.mxu0 0
  %182 = vmatpush1.bf16.msra.mxu0 %v171
  %183 = vmatprep.subr.bf16.mxu0 0
  %184 = vmatpush1.bf16.msra.mxu0 0
  %185 = vmatprep.subr.bf16.mxu0 0
  %186 = vmatpush1.bf16.msra.mxu0 0
  %187 = vmatprep.subr.bf16.mxu0 0
  %188 = vmatpush1.bf16.msra.mxu0 0
  %189 = vmatprep.subr.bf16.mxu0 0
  %190 = vmatpush1.bf16.msra.mxu0 0
  %191 = vmatprep.subr.bf16.mxu0 0
  %192 = vmatpush1.bf16.msra.mxu0 0
  %193 = vmatprep.subr.bf16.mxu0 0
  %194 = vmatpush1.bf16.msra.mxu0 0
  %195 = vmatprep.subr.bf16.mxu0 0
  %196 = vmatpush1.bf16.msra.mxu0 0
  %197 = vmatprep.subr.bf16.mxu0 0
  %198 = vmatpush1.bf16.msra.mxu0 0
  %199 = vmatprep.subr.bf16.mxu0 0
  %200 = vmatpush1.bf16.msra.mxu0 0
  %201 = vmatprep.subr.bf16.mxu0 0
  %202 = vmatpush1.bf16.msra.mxu0 0
  %203 = vmatprep.subr.bf16.mxu0 0
  %204 = vmatpush1.bf16.msra.mxu0 0
  %205 = vmatprep.subr.bf16.mxu0 0
  %206 = vmatpush1.bf16.msra.mxu0 0
  %207 = vmatprep.subr.bf16.mxu0 0
  %208 = vmatpush1.bf16.msra.mxu0 0
  %209 = vmatprep.subr.bf16.mxu0 0
  %210 = vmatpush1.bf16.msra.mxu0 0
  %211 = vmatprep.mubr.bf16.mxu0 0
  %212 = vmatmul.mubr.bf16.gmra.mrb[0].mxu0 %v48
  %v213 = vpop.f32.mrb[0].mxu0
  %v214 = vadd.f32 %v177, %v213
  %v215 = vpop.f32.mrb[0].mxu0
  %v216 = vpop.f32.mrb[0].mxu0
  %v217 = vadd.f32 %v177, %v216
  %v218 = vpop.f32.mrb[0].mxu0
  %219 = vdwg.mxu0
  %v220 = vpack.c.bf16 %v217, %v214
  %v222 = vunpack.c.l.b16 %v220
  %v223 = vunpack.c.h.b16 %v220
  %v224 = vpack.c.b16 %v222, %v222
  %v225 = vpack.c.b16 %v223, %v223
  %228 = vst.msk [vmem:[%s9] sm:$0xf] %vm99, %v224
  %229 = vst.msk [vmem:[%s9 + $0x4] sm:$0xf] %vm99, %v225
  // Predicated region
  $region30: #{_lambda_.25} parent=0 // pred_check
    _
  $region31: #{_lambda_.25} parent=0 // pred_check_branch
    %231 = sbr.rel (0) target = $region33
  $region32: #{_lambda_.25} parent=0 // pred_region
    _
  $region33: #{_lambda_.25} parent=0 // pred_fallthru
    _
  // Predicated region
  $region34: #{_lambda_.25} parent=0 // pred_check
    _
  $region35: #{_lambda_.25} parent=0 // pred_check_branch
    %233 = sbr.rel (0) target = $region37
  $region36: #{_lambda_.25} parent=0 // pred_region
    _
  $region37: #{_lambda_.25} parent=0 // pred_fallthru
    _
  // Predicated region
  $region38: #{_lambda_.25} parent=0 // pred_check
    _
  $region39: #{_lambda_.25} parent=0 // pred_check_branch
    %235 = sbr.rel (0) target = $region41
  $region40: #{_lambda_.25} parent=0 // pred_region
    _
  $region41: #{_lambda_.25} parent=0 // pred_fallthru
    _
  // Predicated region
  $region42: #{_lambda_.25} parent=0 // pred_check
    _
  $region43: #{_lambda_.25} parent=0 // pred_check_branch
    %237 = sbr.rel (0) target = $region45
  $region44: #{_lambda_.25} parent=0 // pred_region
    _
  $region45: #{_lambda_.25} parent=0 // pred_fallthru
    _
  // Predicated region
  $region46: #{_lambda_.25} parent=0 // pred_check
    _
  $region47: #{_lambda_.25} parent=0 // pred_check_branch
    %239 = sbr.rel (0) target = $region49
  $region48: #{_lambda_.25} parent=0 // pred_region
    _
  $region49: #{_lambda_.25} parent=0 // pred_fallthru
    _
  // Predicated region
  $region50: #{_lambda_.25} parent=0 // pred_check
    _
  $region51: #{_lambda_.25} parent=0 // pred_check_branch
    %241 = sbr.rel (0) target = $region53
  $region52: #{_lambda_.25} parent=0 // pred_region
    _
  $region53: #{_lambda_.25} parent=0 // pred_fallthru
    _

// kernel: _lambda_.28
$region0: #{_lambda_.28}
  #allocation0 [shape = 'u32[]', space=smem, size = 0x4, offset = 0x4, fixed_abs, tag = 'smem constant byte address 0x4 - core index']
  #allocation1 [shape = 'u32[144,128]{1,0:T(1,128)}', space=vmem, size = 0x12000, scoped, tag = 'internal scratch']
  %s0 = inlined_call_operand.vmem [shape: f32[16,32], index: 0, kind: input, shape index: {}]
  %s1 = inlined_call_operand.vmem [shape: f32[32,64], index: 1, kind: input, shape index: {}]
  %s2 = inlined_call_operand.vmem [shape: f32[1,64], index: 2, kind: input, shape index: {}]
  %s3 = inlined_call_operand.vmem [shape: f32[64,32], index: 3, kind: input, shape index: {}]
  %s4 = inlined_call_operand.vmem [shape: f32[1,32], index: 4, kind: input, shape index: {}]
  %s5 = inlined_call_operand.vmem [shape: f32[1,32], index: 5, kind: input, shape index: {}]
  %s6 = inlined_call_operand.vmem [shape: f32[1,32], index: 6, kind: input, shape index: {}]
  %s7 = inlined_call_operand.vmem [shape: f32[16,32], index: 7, kind: output, shape index: {}]
  %s8 = sld [smem:[#allocation0]]
  $region38: #{_lambda_.28} parent=0
    _
  %s10 = ssub.s32 1, %s8
  %s11 = scalar_select 0, %s10, %s8
  // Predicated region
  $region2: #{_lambda_.28} parent=0 // pred_check
    _
  $region3: #{_lambda_.28} parent=0 // pred_check_branch
    %13 = sbr.rel (0) target = $region5
  $region4: #{_lambda_.28} parent=0 // pred_region
    _
  $region5: #{_lambda_.28} parent=0 // pred_fallthru
    _
  // Predicated region
  $region6: #{_lambda_.28} parent=0 // pred_check
    _
  $region7: #{_lambda_.28} parent=0 // pred_check_branch
    %15 = sbr.rel (0) target = $region9
  $region8: #{_lambda_.28} parent=0 // pred_region
    _
  $region9: #{_lambda_.28} parent=0 // pred_fallthru
    _
  // Predicated region
  $region10: #{_lambda_.28} parent=0 // pred_check
    _
  $region11: #{_lambda_.28} parent=0 // pred_check_branch
    %17 = sbr.rel (0) target = $region13
  $region12: #{_lambda_.28} parent=0 // pred_region
    _
  $region13: #{_lambda_.28} parent=0 // pred_fallthru
    _
  // Predicated region
  $region14: #{_lambda_.28} parent=0 // pred_check
    _
  $region15: #{_lambda_.28} parent=0 // pred_check_branch
    %19 = sbr.rel (0) target = $region17
  $region16: #{_lambda_.28} parent=0 // pred_region
    _
  $region17: #{_lambda_.28} parent=0 // pred_fallthru
    _
  // Predicated region
  $region18: #{_lambda_.28} parent=0 // pred_check
    _
  $region19: #{_lambda_.28} parent=0 // pred_check_branch
    %21 = sbr.rel (0) target = $region21
  $region20: #{_lambda_.28} parent=0 // pred_region
    _
  $region21: #{_lambda_.28} parent=0 // pred_fallthru
    _
  // Predicated region
  $region22: #{_lambda_.28} parent=0 // pred_check
    _
  $region23: #{_lambda_.28} parent=0 // pred_check_branch
    %23 = sbr.rel (0) target = $region25
  $region24: #{_lambda_.28} parent=0 // pred_region
    _
  $region25: #{_lambda_.28} parent=0 // pred_fallthru
    _
  // Predicated region
  $region26: #{_lambda_.28} parent=0 // pred_check
    _
  $region27: #{_lambda_.28} parent=0 // pred_check_branch
    %25 = sbr.rel (0) target = $region29
  $region28: #{_lambda_.28} parent=0 // pred_region
    _
  $region29: #{_lambda_.28} parent=0 // pred_fallthru
    _
  %v27 = vld [vmem:[%s0] sm:$0xff]
  %v28 = vld [vmem:[%s0 + $0x8] sm:$0xff]
  %v29 = vpack.c.bf16 %v28, %v27
  %v30 = vld [vmem:[%s1] sm:$0xff]
  %v31 = vld [vmem:[%s1 + $0x8] sm:$0xff]
  %v32 = vld [vmem:[%s1 + $0x10] sm:$0xff]
  %v33 = vld [vmem:[%s1 + $0x18] sm:$0xff]
  %v34 = vpack.c.bf16 %v31, %v30
  %v35 = vpack.c.bf16 %v33, %v32
  %v36 = vld [vmem:[%s2] sm:$0x1]
  %v38 = vlaneseq
  %v39 = vshrl.u32 %v38, 7
  %v40 = vsub.s32 0, %v39
  %v41 = vrot.slane %v36, %v40
  %vm43 = vcmask 261120
  %v45 = vsel %vm43, %v29, 0
  %47 = vmatprep.subr.bf16.mxu0 0
  %48 = vmatpush1.bf16.msra.mxu0 %v34
  %49 = vmatprep.subr.bf16.mxu0 0
  %50 = vmatpush1.bf16.msra.mxu0 %v35
  %51 = vmatprep.subr.bf16.mxu0 0
  %52 = vmatpush1.bf16.msra.mxu0 0
  %53 = vmatprep.subr.bf16.mxu0 0
  %54 = vmatpush1.bf16.msra.mxu0 0
  %55 = vmatprep.subr.bf16.mxu0 0
  %56 = vmatpush1.bf16.msra.mxu0 0
  %57 = vmatprep.subr.bf16.mxu0 0
  %58 = vmatpush1.bf16.msra.mxu0 0
  %59 = vmatprep.subr.bf16.mxu0 0
  %60 = vmatpush1.bf16.msra.mxu0 0
  %61 = vmatprep.subr.bf16.mxu0 0
  %62 = vmatpush1.bf16.msra.mxu0 0
  %63 = vmatprep.subr.bf16.mxu0 0
  %64 = vmatpush1.bf16.msra.mxu0 0
  %65 = vmatprep.subr.bf16.mxu0 0
  %66 = vmatpush1.bf16.msra.mxu0 0
  %67 = vmatprep.subr.bf16.mxu0 0
  %68 = vmatpush1.bf16.msra.mxu0 0
  %69 = vmatprep.subr.bf16.mxu0 0
  %70 = vmatpush1.bf16.msra.mxu0 0
  %71 = vmatprep.subr.bf16.mxu0 0
  %72 = vmatpush1.bf16.msra.mxu0 0
  %73 = vmatprep.subr.bf16.mxu0 0
  %74 = vmatpush1.bf16.msra.mxu0 0
  %75 = vmatprep.subr.bf16.mxu0 0
  %76 = vmatpush1.bf16.msra.mxu0 0
  %77 = vmatprep.subr.bf16.mxu0 0
  %78 = vmatpush1.bf16.msra.mxu0 0
  %79 = vmatprep.mubr.bf16.mxu0 0
  %80 = vmatmul.mubr.bf16.gmra.mrb[0].mxu0 %v45
  %v81 = vpop.f32.mrb[0].mxu0
  %v82 = vadd.f32 %v41, %v81
  %v83 = vpop.f32.mrb[0].mxu0
  %v84 = vpop.f32.mrb[0].mxu0
  %v85 = vadd.f32 %v41, %v84
  %v86 = vpop.f32.mrb[0].mxu0
  %87 = vdwg.mxu0
  %v88 = vmax.f32 %v82, 0.0
  %v89 = vmax.f32 %v85, 0.0
  %v90 = vpack.c.bf16 %v89, %v88
  %v91 = vld [vmem:[%s3] sm:$0xff]
  %v92 = vld [vmem:[%s3 + $0x8] sm:$0xff]
  %v93 = vld [vmem:[%s3 + $0x10] sm:$0xff]
  %v94 = vld [vmem:[%s3 + $0x18] sm:$0xff]
  %v95 = vld [vmem:[%s3 + $0x20] sm:$0xff]
  %v96 = vld [vmem:[%s3 + $0x28] sm:$0xff]
  %v97 = vld [vmem:[%s3 + $0x30] sm:$0xff]
  %v98 = vld [vmem:[%s3 + $0x38] sm:$0xff]
  %v99 = vpack.c.bf16 %v92, %v91
  %v100 = vpack.c.bf16 %v94, %v93
  %v101 = vpack.c.bf16 %v96, %v95
  %v102 = vpack.c.bf16 %v98, %v97
  %v103 = vld [vmem:[%s4] sm:$0x1]
  %v105 = vlaneseq
  %v106 = vshrl.u32 %v105, 7
  %v107 = vsub.s32 0, %v106
  %v108 = vrot.slane %v103, %v107
  %vm110 = vcmask 523264
  %v112 = vsel %vm110, %v90, 0
  %114 = vmatprep.subr.bf16.mxu0 0
  %115 = vmatpush1.bf16.msra.mxu0 %v99
  %116 = vmatprep.subr.bf16.mxu0 0
  %117 = vmatpush1.bf16.msra.mxu0 %v100
  %118 = vmatprep.subr.bf16.mxu0 0
  %119 = vmatpush1.bf16.msra.mxu0 %v101
  %120 = vmatprep.subr.bf16.mxu0 0
  %121 = vmatpush1.bf16.msra.mxu0 %v102
  %122 = vmatprep.subr.bf16.mxu0 0
  %123 = vmatpush1.bf16.msra.mxu0 0
  %124 = vmatprep.subr.bf16.mxu0 0
  %125 = vmatpush1.bf16.msra.mxu0 0
  %126 = vmatprep.subr.bf16.mxu0 0
  %127 = vmatpush1.bf16.msra.mxu0 0
  %128 = vmatprep.subr.bf16.mxu0 0
  %129 = vmatpush1.bf16.msra.mxu0 0
  %130 = vmatprep.subr.bf16.mxu0 0
  %131 = vmatpush1.bf16.msra.mxu0 0
  %132 = vmatprep.subr.bf16.mxu0 0
  %133 = vmatpush1.bf16.msra.mxu0 0
  %134 = vmatprep.subr.bf16.mxu0 0
  %135 = vmatpush1.bf16.msra.mxu0 0
  %136 = vmatprep.subr.bf16.mxu0 0
  %137 = vmatpush1.bf16.msra.mxu0 0
  %138 = vmatprep.subr.bf16.mxu0 0
  %139 = vmatpush1.bf16.msra.mxu0 0
  %140 = vmatprep.subr.bf16.mxu0 0
  %141 = vmatpush1.bf16.msra.mxu0 0
  %142 = vmatprep.subr.bf16.mxu0 0
  %143 = vmatpush1.bf16.msra.mxu0 0
  %144 = vmatprep.subr.bf16.mxu0 0
  %145 = vmatpush1.bf16.msra.mxu0 0
  %146 = vmatprep.mubr.bf16.mxu0 0
  %147 = vmatmul.mubr.bf16.gmra.mrb[0].mxu0 %v112
  %v148 = vpop.f32.mrb[0].mxu0
  %v149 = vadd.f32 %v108, %v148
  %v150 = vpop.f32.mrb[0].mxu0
  %v151 = vpop.f32.mrb[0].mxu0
  %v152 = vadd.f32 %v108, %v151
  %v153 = vpop.f32.mrb[0].mxu0
  %154 = vdwg.mxu0
  %v155 = vadd.f32 %v149, %v27
  %v156 = vadd.f32 %v152, %v28
  %v157 = vsel %vm43, %v155, 0.0
  %158 = vadd.xlane.f32.xlu0 %v157
  %v159 = vpop.xlane.xlu0 %158
  %v160 = vsel %vm43, %v156, 0.0
  %161 = vadd.xlane.f32.xlu0 %v160
  %v162 = vpop.xlane.xlu0 %161
  %v163 = vrcp.pop 32.0
  %v164 = vmul.f32 %v159, %v163
  %v165 = vmul.f32 %v162, %v163
  %v166 = vsub.f32 %v155, %v164
  %v167 = vsub.f32 %v156, %v165
  %v168 = vmul.f32 %v166, %v166
  %v169 = vmul.f32 %v167, %v167
  %v170 = vsel %vm43, %v168, 0.0
  %171 = vadd.xlane.f32.xlu0 %v170
  %v172 = vpop.xlane.xlu0 %171
  %v173 = vsel %vm43, %v169, 0.0
  %174 = vadd.xlane.f32.xlu0 %v173
  %v175 = vpop.xlane.xlu0 %174
  %v176 = vmul.f32 %v172, %v163
  %v177 = vmul.f32 %v175, %v163
  %v178 = vadd.f32 %v176, 1e-05
  %v179 = vadd.f32 %v177, 1e-05
  %v180 = vrsqrt.pop %v178
  %v181 = vrsqrt.pop %v179
  %v182 = vmul.f32 %v166, %v180
  %v183 = vmul.f32 %v167, %v181
  %v184 = vld [vmem:[%s5] sm:$0x1]
  %v186 = vlaneseq
  %v187 = vshrl.u32 %v186, 7
  %v188 = vsub.s32 0, %v187
  %v189 = vrot.slane %v184, %v188
  %v191 = vmul.f32 %v182, %v189
  %v192 = vmul.f32 %v183, %v189
  %v193 = vld [vmem:[%s6] sm:$0x1]
  %v195 = vlaneseq
  %v196 = vshrl.u32 %v195, 7
  %v197 = vsub.s32 0, %v196
  %v198 = vrot.slane %v193, %v197
  %v200 = vadd.f32 %v191, %v198
  %v201 = vadd.f32 %v192, %v198
  %202 = vst.msk [vmem:[%s7] sm:$0xff] %vm43, %v200
  %203 = vst.msk [vmem:[%s7 + $0x8] sm:$0xff] %vm43, %v201
  // Predicated region
  $region30: #{_lambda_.28} parent=0 // pred_check
    _
  $region31: #{_lambda_.28} parent=0 // pred_check_branch
    %205 = sbr.rel (0) target = $region33
  $region32: #{_lambda_.28} parent=0 // pred_region
    _
  $region33: #{_lambda_.28} parent=0 // pred_fallthru
    _
  // Predicated region
  $region34: #{_lambda_.28} parent=0 // pred_check
    _
  $region35: #{_lambda_.28} parent=0 // pred_check_branch
    %207 = sbr.rel (0) target = $region37
  $region36: #{_lambda_.28} parent=0 // pred_region
    _
  $region37: #{_lambda_.28} parent=0 // pred_fallthru
    _

// kernel: _lambda_.26
$region0: #{_lambda_.26}
  #allocation0 [shape = 'u32[]', space=smem, size = 0x4, offset = 0x4, fixed_abs, tag = 'smem constant byte address 0x4 - core index']
  #allocation1 [shape = 'u32[144,128]{1,0:T(1,128)}', space=vmem, size = 0x12000, scoped, tag = 'internal scratch']
  %s0 = inlined_call_operand.vmem [shape: bf16[2,8,32], index: 0, kind: input, shape index: {}]
  %s1 = inlined_call_operand.vmem [shape: bf16[2,8,32], index: 1, kind: input, shape index: {}]
  %s2 = inlined_call_operand.vmem [shape: bf16[2,8,32], index: 2, kind: input, shape index: {}]
  %s3 = inlined_call_operand.vmem [shape: f32[2,8,8], index: 3, kind: input, shape index: {}]
  %s4 = inlined_call_operand.vmem [shape: f32[2,8,32], index: 4, kind: output, shape index: {}]
  %s5 = sld [smem:[#allocation0]]
  $region49: #{_lambda_.26} parent=0
    _
  %s7 = ssub.s32 1, %s5
  %s8 = scalar_select 0, %s7, %s5
  loop: start=0, step=1, limit=4
  $region2: #{_lambda_.26} parent=0 // loop_pre_header
    _
  $region3: #{_lambda_.26} parent=0 // loop_header
    %s10 = sphi 0, %s14
    %p11 = scmp.ge.s32.totalorder %s10, 4
    %s20 = sphi 0, %s22
    %s23 = sphi 0, %s20
    %s24 = sphi 0, %s23
    %s40 = sphi 0, %s24
    %s46 = sphi 0, %s48
    %s49 = sphi 0, %s46
    %s50 = sphi 0, %s49
    %s66 = sphi 0, %s50
    %s72 = sphi 0, %s74
    %s75 = sphi 0, %s72
    %s76 = sphi 0, %s75
    %s92 = sphi 0, %s76
    %s98 = sphi 0, %s100
    %s101 = sphi 0, %s98
    %s102 = sphi 0, %s101
    %s118 = sphi 0, %s102
    %s124 = sphi 0, %s126
    %s127 = sphi 0, %s124
    %s128 = sphi 0, %s127
    %s144 = sphi 0, %s128
  $region4: #{_lambda_.26} parent=0 // loop_header_branch
    %13 = sbr.rel (%p11) target = $region8
  $region5: #{_lambda_.26} parent=0 // loop_body
    %s15 = ssub.s32 %s10, 1
    %s16 = ssub.s32 %s10, 2
    %s17 = sadd.s32 %s10, 1
    %s18 = ssub.s32 %s10, %s17
    %p19 = scmp.eq.s32.totalorder %s18, 0
    %s21 = sadd.s32 %s20, 1
    %s22 = scalar_select %p19, %s20, %s21
    %p25 = pneg %p19
    %p26 = scmp.eq.s32.totalorder %s10, 1
    %p27 = por %p25, %p26
    %p28 = scmp.ne.s32.totalorder %s20, %s23
    %p29 = scmp.eq.s32.totalorder %s10, 0
    %p30 = por %p28, %p29
    %p31 = scmp.ne.s32.totalorder %s20, %s23
    %p32 = scmp.eq.s32.totalorder %s15, 1
    %p33 = por %p31, %p32
    %p34 = scmp.ne.s32.totalorder %s23, %s24
    %p35 = scmp.eq.s32.totalorder %s15, 0
    %p36 = por %p34, %p35
    %p37 = scmp.ne.s32.totalorder %s23, %s24
    %p38 = scmp.eq.s32.totalorder %s16, 1
    %p39 = por %p37, %p38
    %p41 = scmp.ne.s32.totalorder %s24, %s40
    %p42 = scmp.eq.s32.totalorder %s16, 0
    %p43 = por %p41, %p42
    %s44 = ssub.s32 %s10, %s17
    %p45 = scmp.eq.s32.totalorder %s44, 0
    %s47 = sadd.s32 %s46, 1
    %s48 = scalar_select %p45, %s46, %s47
    %p51 = pneg %p45
    %p52 = scmp.eq.s32.totalorder %s10, 1
    %p53 = por %p51, %p52
    %p54 = scmp.ne.s32.totalorder %s46, %s49
    %p55 = scmp.eq.s32.totalorder %s10, 0
    %p56 = por %p54, %p55
    %p57 = scmp.ne.s32.totalorder %s46, %s49
    %p58 = scmp.eq.s32.totalorder %s15, 1
    %p59 = por %p57, %p58
    %p60 = scmp.ne.s32.totalorder %s49, %s50
    %p61 = scmp.eq.s32.totalorder %s15, 0
    %p62 = por %p60, %p61
    %p63 = scmp.ne.s32.totalorder %s49, %s50
    %p64 = scmp.eq.s32.totalorder %s16, 1
    %p65 = por %p63, %p64
    %p67 = scmp.ne.s32.totalorder %s50, %s66
    %p68 = scmp.eq.s32.totalorder %s16, 0
    %p69 = por %p67, %p68
    %s70 = ssub.s32 %s10, %s17
    %p71 = scmp.eq.s32.totalorder %s70, 0
    %s73 = sadd.s32 %s72, 1
    %s74 = scalar_select %p71, %s72, %s73
    %p77 = pneg %p71
    %p78 = scmp.eq.s32.totalorder %s10, 1
    %p79 = por %p77, %p78
    %p80 = scmp.ne.s32.totalorder %s72, %s75
    %p81 = scmp.eq.s32.totalorder %s10, 0
    %p82 = por %p80, %p81
    %p83 = scmp.ne.s32.totalorder %s72, %s75
    %p84 = scmp.eq.s32.totalorder %s15, 1
    %p85 = por %p83, %p84
    %p86 = scmp.ne.s32.totalorder %s75, %s76
    %p87 = scmp.eq.s32.totalorder %s15, 0
    %p88 = por %p86, %p87
    %p89 = scmp.ne.s32.totalorder %s75, %s76
    %p90 = scmp.eq.s32.totalorder %s16, 1
    %p91 = por %p89, %p90
    %p93 = scmp.ne.s32.totalorder %s76, %s92
    %p94 = scmp.eq.s32.totalorder %s16, 0
    %p95 = por %p93, %p94
    %s96 = ssub.s32 %s10, %s17
    %p97 = scmp.eq.s32.totalorder %s96, 0
    %s99 = sadd.s32 %s98, 1
    %s100 = scalar_select %p97, %s98, %s99
    %p103 = pneg %p97
    %p104 = scmp.eq.s32.totalorder %s10, 1
    %p105 = por %p103, %p104
    %p106 = scmp.ne.s32.totalorder %s98, %s101
    %p107 = scmp.eq.s32.totalorder %s10, 0
    %p108 = por %p106, %p107
    %p109 = scmp.ne.s32.totalorder %s98, %s101
    %p110 = scmp.eq.s32.totalorder %s15, 1
    %p111 = por %p109, %p110
    %p112 = scmp.ne.s32.totalorder %s101, %s102
    %p113 = scmp.eq.s32.totalorder %s15, 0
    %p114 = por %p112, %p113
    %p115 = scmp.ne.s32.totalorder %s101, %s102
    %p116 = scmp.eq.s32.totalorder %s16, 1
    %p117 = por %p115, %p116
    %p119 = scmp.ne.s32.totalorder %s102, %s118
    %p120 = scmp.eq.s32.totalorder %s16, 0
    %p121 = por %p119, %p120
    %s122 = ssub.s32 %s10, %s17
    %p123 = scmp.eq.s32.totalorder %s122, 0
    %s125 = sadd.s32 %s124, 1
    %s126 = scalar_select %p123, %s124, %s125
    %p129 = pneg %p123
    %p130 = scmp.eq.s32.totalorder %s10, 1
    %p131 = por %p129, %p130
    %p132 = scmp.ne.s32.totalorder %s124, %s127
    %p133 = scmp.eq.s32.totalorder %s10, 0
    %p134 = por %p132, %p133
    %p135 = scmp.ne.s32.totalorder %s124, %s127
    %p136 = scmp.eq.s32.totalorder %s15, 1
    %p137 = por %p135, %p136
    %p138 = scmp.ne.s32.totalorder %s127, %s128
    %p139 = scmp.eq.s32.totalorder %s15, 0
    %p140 = por %p138, %p139
    %p141 = scmp.ne.s32.totalorder %s127, %s128
    %p142 = scmp.eq.s32.totalorder %s16, 1
    %p143 = por %p141, %p142
    %p145 = scmp.ne.s32.totalorder %s128, %s144
    %p146 = scmp.eq.s32.totalorder %s16, 0
    %p147 = por %p145, %p146
    %p148 = scmp.le.s32.totalorder 1, %s10
    %p149 = scmp.lt.s32.totalorder %s10, 3
    %p150 = pnand %p148, %p149
    %p151 = pneg %p150
    // Predicated region
    $region9: #{_lambda_.26} parent=5 // pred_check
      _
    $region10: #{_lambda_.26} parent=5 // pred_check_branch
      %153 = sbr.rel (%p150) target = $region12
    $region11: #{_lambda_.26} parent=5 // pred_region
      %s154 = ssub.s32 %s10, 1
    $region12: #{_lambda_.26} parent=5 // pred_fallthru
      _
    %p155 = scmp.lt.s32.totalorder %s10, 2
    // Predicated region
    $region13: #{_lambda_.26} parent=5 // pred_check
      %p156 = pneg %p155
    $region14: #{_lambda_.26} parent=5 // pred_check_branch
      %158 = sbr.rel (%p156) target = $region16
    $region15: #{_lambda_.26} parent=5 // pred_region
      // Predicated region
      $region17: #{_lambda_.26} parent=15 // pred_check
        %p159 = pneg %p30
      $region18: #{_lambda_.26} parent=15 // pred_check_branch
        %161 = sbr.rel (%p159) target = $region20
      $region19: #{_lambda_.26} parent=15 // pred_region
        %p162 = scmp.lt.s32.totalorder %s10, 1
        %s163 = scalar_select %p162, %s10, 1
        %s164 = smul.addr %s163, 4
        %s165 = scalar_lea.vmem %s0, %s164
      $region20: #{_lambda_.26} parent=15 // pred_fallthru
        _
      // Predicated region
      $region21: #{_lambda_.26} parent=15 // pred_check
        %p166 = pneg %p56
      $region22: #{_lambda_.26} parent=15 // pred_check_branch
        %168 = sbr.rel (%p166) target = $region24
      $region23: #{_lambda_.26} parent=15 // pred_region
        %p169 = scmp.lt.s32.totalorder %s10, 1
        %s170 = scalar_select %p169, %s10, 1
        %s171 = smul.addr %s170, 4
        %s172 = scalar_lea.vmem %s1, %s171
      $region24: #{_lambda_.26} parent=15 // pred_fallthru
        _
      // Predicated region
      $region25: #{_lambda_.26} parent=15 // pred_check
        %p173 = pneg %p82
      $region26: #{_lambda_.26} parent=15 // pred_check_branch
        %175 = sbr.rel (%p173) target = $region28
      $region27: #{_lambda_.26} parent=15 // pred_region
        %p176 = scmp.lt.s32.totalorder %s10, 1
        %s177 = scalar_select %p176, %s10, 1
        %s178 = smul.addr %s177, 4
        %s179 = scalar_lea.vmem %s2, %s178
      $region28: #{_lambda_.26} parent=15 // pred_fallthru
        _
      // Predicated region
      $region29: #{_lambda_.26} parent=15 // pred_check
        %p180 = pneg %p108
      $region30: #{_lambda_.26} parent=15 // pred_check_branch
        %182 = sbr.rel (%p180) target = $region32
      $region31: #{_lambda_.26} parent=15 // pred_region
        %p183 = scmp.lt.s32.totalorder %s10, 1
        %s184 = scalar_select %p183, %s10, 1
        %s185 = smul.addr %s184, 8
        %s186 = scalar_lea.vmem %s3, %s185
      $region32: #{_lambda_.26} parent=15 // pred_fallthru
        _
    $region16: #{_lambda_.26} parent=5 // pred_fallthru
      _
    %p187 = scmp.le.s32.totalorder 1, %s10
    %p188 = scmp.lt.s32.totalorder %s10, 3
    %p189 = pnand %p187, %p188
    %p190 = pneg %p189
    // Predicated region
    $region33: #{_lambda_.26} parent=5 // pred_check
      _
    $region34: #{_lambda_.26} parent=5 // pred_check_branch
      %192 = sbr.rel (%p189) target = $region36
    $region35: #{_lambda_.26} parent=5 // pred_region
      %s193 = ssub.s32 %s10, 1
      %p194 = scmp.lt.s32.totalorder %s15, 1
      %s195 = scalar_select %p194, %s15, 1
      %s196 = smul.addr %s195, 4
      %s197 = scalar_lea.vmem %s0, %s196
      %p198 = pneg %p36
      %p199 = pneg %p33
      %p200 = scmp.lt.s32.totalorder %s15, 1
      %s201 = scalar_select %p200, %s15, 1
      %s202 = smul.addr %s201, 4
      %s203 = scalar_lea.vmem %s1, %s202
      %p204 = pneg %p62
      %p205 = pneg %p59
      %p206 = scmp.lt.s32.totalorder %s15, 1
      %s207 = scalar_select %p206, %s15, 1
      %s208 = smul.addr %s207, 4
      %s209 = scalar_lea.vmem %s2, %s208
      %p210 = pneg %p88
      %p211 = pneg %p85
      %p212 = scmp.lt.s32.totalorder %s15, 1
      %s213 = scalar_select %p212, %s15, 1
      %s214 = smul.addr %s213, 8
      %s215 = scalar_lea.vmem %s3, %s214
      %p216 = pneg %p114
      %p217 = pneg %p111
      %p218 = pneg %p140
      %p219 = pneg %p137
      %p220 = scmp.lt.s32.totalorder %s15, 1
      %s221 = scalar_select %p220, %s15, 1
      %s222 = smul.addr %s221, 8
      %s223 = scalar_lea.vmem %s4, %s222
      %p224 = scmp.lt.s32.totalorder %s15, 1
      %s225 = scalar_select %p224, %s15, 1
      %s226 = smul.addr %s225, 4
      %s227 = scalar_lea.vmem %s0, %s226
      %p228 = scmp.lt.s32.totalorder %s15, 1
      %s229 = scalar_select %p228, %s15, 1
      %s230 = smul.addr %s229, 4
      %s231 = scalar_lea.vmem %s1, %s230
      %p232 = scmp.lt.s32.totalorder %s15, 1
      %s233 = scalar_select %p232, %s15, 1
      %s234 = smul.addr %s233, 4
      %s235 = scalar_lea.vmem %s2, %s234
      %p236 = scmp.lt.s32.totalorder %s15, 1
      %s237 = scalar_select %p236, %s15, 1
      %s238 = smul.addr %s237, 8
      %s239 = scalar_lea.vmem %s3, %s238
      %p240 = scmp.lt.s32.totalorder %s15, 1
      %s241 = scalar_select %p240, %s15, 1
      %s242 = smul.addr %s241, 8
      %s243 = scalar_lea.vmem %s4, %s242
      %v245 = vld [vmem:[%s227] sm:$0xf]
      %v246 = vld [vmem:[%s231] sm:$0xf]
      %v247 = vld [vmem:[%s235] sm:$0xf]
      %v248 = vld [vmem:[%s239] sm:$0xff]
      %vm249 = vcmask 64512
      %v251 = vsel %vm249, %v245, 0
      %v254 = vsel %vm249, %v246, 0
      %256 = vmatprep.subr.bf16.mxu0 0
      %257 = vmatpush1.bf16.xpose.msra.mxu0 %v254
      %258 = vmatprep.subr.bf16.mxu0 0
      %259 = vmatpush1.bf16.xpose.msra.mxu0 0
      %260 = vmatprep.subr.bf16.mxu0 0
      %261 = vmatpush1.bf16.xpose.msra.mxu0 0
      %262 = vmatprep.subr.bf16.mxu0 0
      %263 = vmatpush1.bf16.xpose.msra.mxu0 0
      %264 = vmatprep.subr.bf16.mxu0 0
      %265 = vmatpush1.bf16.xpose.msra.mxu0 0
      %266 = vmatprep.subr.bf16.mxu0 0
      %267 = vmatpush1.bf16.xpose.msra.mxu0 0
      %268 = vmatprep.subr.bf16.mxu0 0
      %269 = vmatpush1.bf16.xpose.msra.mxu0 0
      %270 = vmatprep.subr.bf16.mxu0 0
      %271 = vmatpush1.bf16.xpose.msra.mxu0 0
      %272 = vmatprep.subr.bf16.mxu0 0
      %273 = vmatpush1.bf16.xpose.msra.mxu0 0
      %274 = vmatprep.subr.bf16.mxu0 0
      %275 = vmatpush1.bf16.xpose.msra.mxu0 0
      %276 = vmatprep.subr.bf16.mxu0 0
      %277 = vmatpush1.bf16.xpose.msra.mxu0 0
      %278 = vmatprep.subr.bf16.mxu0 0
      %279 = vmatpush1.bf16.xpose.msra.mxu0 0
      %280 = vmatprep.subr.bf16.mxu0 0
      %281 = vmatpush1.bf16.xpose.msra.mxu0 0
      %282 = vmatprep.subr.bf16.mxu0 0
      %283 = vmatpush1.bf16.xpose.msra.mxu0 0
      %284 = vmatprep.subr.bf16.mxu0 0
      %285 = vmatpush1.bf16.xpose.msra.mxu0 0
      %286 = vmatprep.subr.bf16.mxu0 0
      %287 = vmatpush1.bf16.xpose.msra.mxu0 0
      %288 = vmatprep.mubr.bf16.mxu0 0
      %289 = vmatmul.mubr.bf16.gmra.mrb[0].mxu0 %v251
      %v290 = vpop.f32.mrb[0].mxu0
      %v291 = vadd.f32 0.0, %v290
      %v292 = vpop.f32.mrb[0].mxu0
      %v293 = vpop.f32.mrb[0].mxu0
      %v294 = vpop.f32.mrb[0].mxu0
      %295 = vdwg.mxu0
      %v296 = vmul.f32 %v291, 0.35355338
      %vm297 = vcmp.gt.f32.partialorder %v248, 0.0
      %v298 = vsel %vm297, %v296, -1e+09
      %v299 = vsel %vm249, %v298, -inf
      %300 = vmax.xlane.f32.xlu0 %v299
      %v301 = vpop.xlane.xlu0 %300
      %v302 = vsub.f32 %v298, %v301
      %v303 = vmul.f32 %v302, 1.442695
      %v304 = vpow.pop %v303
      %v305 = vsel %vm249, %v304, 0.0
      %306 = vadd.xlane.f32.xlu0 %v305
      %v307 = vpop.xlane.xlu0 %306
      %v308 = vrcp.pop %v307
      %v309 = vmul.f32 %v304, %v308
      %v310 = vpack.c.bf16 %v309, %v309
      %v312 = vsel %vm249, %v310, 0
      %vm314 = vcmask 1043456
      %v316 = vsel %vm314, %v247, 0
      %318 = vmatprep.subr.bf16.mxu0 0
      %319 = vmatpush1.bf16.msra.mxu0 %v316
      %320 = vmatprep.subr.bf16.mxu0 0
      %321 = vmatpush1.bf16.msra.mxu0 0
      %322 = vmatprep.subr.bf16.mxu0 0
      %323 = vmatpush1.bf16.msra.mxu0 0
      %324 = vmatprep.subr.bf16.mxu0 0
      %325 = vmatpush1.bf16.msra.mxu0 0
      %326 = vmatprep.subr.bf16.mxu0 0
      %327 = vmatpush1.bf16.msra.mxu0 0
      %328 = vmatprep.subr.bf16.mxu0 0
      %329 = vmatpush1.bf16.msra.mxu0 0
      %330 = vmatprep.subr.bf16.mxu0 0
      %331 = vmatpush1.bf16.msra.mxu0 0
      %332 = vmatprep.subr.bf16.mxu0 0
      %333 = vmatpush1.bf16.msra.mxu0 0
      %334 = vmatprep.subr.bf16.mxu0 0
      %335 = vmatpush1.bf16.msra.mxu0 0
      %336 = vmatprep.subr.bf16.mxu0 0
      %337 = vmatpush1.bf16.msra.mxu0 0
      %338 = vmatprep.subr.bf16.mxu0 0
      %339 = vmatpush1.bf16.msra.mxu0 0
      %340 = vmatprep.subr.bf16.mxu0 0
      %341 = vmatpush1.bf16.msra.mxu0 0
      %342 = vmatprep.subr.bf16.mxu0 0
      %343 = vmatpush1.bf16.msra.mxu0 0
      %344 = vmatprep.subr.bf16.mxu0 0
      %345 = vmatpush1.bf16.msra.mxu0 0
      %346 = vmatprep.subr.bf16.mxu0 0
      %347 = vmatpush1.bf16.msra.mxu0 0
      %348 = vmatprep.subr.bf16.mxu0 0
      %349 = vmatpush1.bf16.msra.mxu0 0
      %350 = vmatprep.mubr.bf16.mxu0 0
      %351 = vmatmul.mubr.bf16.gmra.mrb[0].mxu0 %v312
      %v352 = vpop.f32.mrb[0].mxu0
      %v353 = vadd.f32 0.0, %v352
      %v354 = vpop.f32.mrb[0].mxu0
      %v355 = vpop.f32.mrb[0].mxu0
      %v356 = vpop.f32.mrb[0].mxu0
      %357 = vdwg.mxu0
      %v359 = vunpack.c.l.b16 %v245
      %v360 = vpack.c.b16 %v359, %v359
      %361 = vrot.lane.b32.xlu0 %v360, 120
      %v362 = vpop.permute.xlu0 %361
      %v364 = vunpack.c.l.b16 %v246
      %v365 = vpack.c.b16 %v364, %v364
      %366 = vrot.lane.b32.xlu0 %v365, 120
      %v367 = vpop.permute.xlu0 %366
      %v369 = vsel %vm249, %v362, 0
      %v372 = vsel %vm249, %v367, 0
      %374 = vmatprep.subr.bf16.mxu0 0
      %375 = vmatpush1.bf16.xpose.msra.mxu0 %v372
      %376 = vmatprep.subr.bf16.mxu0 0
      %377 = vmatpush1.bf16.xpose.msra.mxu0 0
      %378 = vmatprep.subr.bf16.mxu0 0
      %379 = vmatpush1.bf16.xpose.msra.mxu0 0
      %380 = vmatprep.subr.bf16.mxu0 0
      %381 = vmatpush1.bf16.xpose.msra.mxu0 0
      %382 = vmatprep.subr.bf16.mxu0 0
      %383 = vmatpush1.bf16.xpose.msra.mxu0 0
      %384 = vmatprep.subr.bf16.mxu0 0
      %385 = vmatpush1.bf16.xpose.msra.mxu0 0
      %386 = vmatprep.subr.bf16.mxu0 0
      %387 = vmatpush1.bf16.xpose.msra.mxu0 0
      %388 = vmatprep.subr.bf16.mxu0 0
      %389 = vmatpush1.bf16.xpose.msra.mxu0 0
      %390 = vmatprep.subr.bf16.mxu0 0
      %391 = vmatpush1.bf16.xpose.msra.mxu0 0
      %392 = vmatprep.subr.bf16.mxu0 0
      %393 = vmatpush1.bf16.xpose.msra.mxu0 0
      %394 = vmatprep.subr.bf16.mxu0 0
      %395 = vmatpush1.bf16.xpose.msra.mxu0 0
      %396 = vmatprep.subr.bf16.mxu0 0
      %397 = vmatpush1.bf16.xpose.msra.mxu0 0
      %398 = vmatprep.subr.bf16.mxu0 0
      %399 = vmatpush1.bf16.xpose.msra.mxu0 0
      %400 = vmatprep.subr.bf16.mxu0 0
      %401 = vmatpush1.bf16.xpose.msra.mxu0 0
      %402 = vmatprep.subr.bf16.mxu0 0
      %403 = vmatpush1.bf16.xpose.msra.mxu0 0
      %404 = vmatprep.subr.bf16.mxu0 0
      %405 = vmatpush1.bf16.xpose.msra.mxu0 0
      %406 = vmatprep.mubr.bf16.mxu0 0
      %407 = vmatmul.mubr.bf16.gmra.mrb[0].mxu0 %v369
      %v408 = vpop.f32.mrb[0].mxu0
      %v409 = vadd.f32 0.0, %v408
      %v410 = vpop.f32.mrb[0].mxu0
      %v411 = vpop.f32.mrb[0].mxu0
      %v412 = vpop.f32.mrb[0].mxu0
      %413 = vdwg.mxu0
      %v414 = vmul.f32 %v409, 0.35355338
      %v415 = vsel %vm297, %v414, -1e+09
      %v416 = vsel %vm249, %v415, -inf
      %417 = vmax.xlane.f32.xlu0 %v416
      %v418 = vpop.xlane.xlu0 %417
      %v419 = vsub.f32 %v415, %v418
      %v420 = vmul.f32 %v419, 1.442695
      %v421 = vpow.pop %v420
      %v422 = vsel %vm249, %v421, 0.0
      %423 = vadd.xlane.f32.xlu0 %v422
      %v424 = vpop.xlane.xlu0 %423
      %v425 = vrcp.pop %v424
      %v426 = vmul.f32 %v421, %v425
      %v427 = vpack.c.bf16 %v426, %v426
      %v429 = vunpack.c.l.b16 %v247
      %v430 = vpack.c.b16 %v429, %v429
      %431 = vrot.lane.b32.xlu0 %v430, 120
      %v432 = vpop.permute.xlu0 %431
      %v434 = vsel %vm249, %v427, 0
      %v437 = vsel %vm314, %v432, 0
      %439 = vmatprep.subr.bf16.mxu0 0
      %440 = vmatpush1.bf16.msra.mxu0 %v437
      %441 = vmatprep.subr.bf16.mxu0 0
      %442 = vmatpush1.bf16.msra.mxu0 0
      %443 = vmatprep.subr.bf16.mxu0 0
      %444 = vmatpush1.bf16.msra.mxu0 0
      %445 = vmatprep.subr.bf16.mxu0 0
      %446 = vmatpush1.bf16.msra.mxu0 0
      %447 = vmatprep.subr.bf16.mxu0 0
      %448 = vmatpush1.bf16.msra.mxu0 0
      %449 = vmatprep.subr.bf16.mxu0 0
      %450 = vmatpush1.bf16.msra.mxu0 0
      %451 = vmatprep.subr.bf16.mxu0 0
      %452 = vmatpush1.bf16.msra.mxu0 0
      %453 = vmatprep.subr.bf16.mxu0 0
      %454 = vmatpush1.bf16.msra.mxu0 0
      %455 = vmatprep.subr.bf16.mxu0 0
      %456 = vmatpush1.bf16.msra.mxu0 0
      %457 = vmatprep.subr.bf16.mxu0 0
      %458 = vmatpush1.bf16.msra.mxu0 0
      %459 = vmatprep.subr.bf16.mxu0 0
      %460 = vmatpush1.bf16.msra.mxu0 0
      %461 = vmatprep.subr.bf16.mxu0 0
      %462 = vmatpush1.bf16.msra.mxu0 0
      %463 = vmatprep.subr.bf16.mxu0 0
      %464 = vmatpush1.bf16.msra.mxu0 0
      %465 = vmatprep.subr.bf16.mxu0 0
      %466 = vmatpush1.bf16.msra.mxu0 0
      %467 = vmatprep.subr.bf16.mxu0 0
      %468 = vmatpush1.bf16.msra.mxu0 0
      %469 = vmatprep.subr.bf16.mxu0 0
      %470 = vmatpush1.bf16.msra.mxu0 0
      %471 = vmatprep.mubr.bf16.mxu0 0
      %472 = vmatmul.mubr.bf16.gmra.mrb[0].mxu0 %v434
      %v473 = vpop.f32.mrb[0].mxu0
      %v474 = vadd.f32 0.0, %v473
      %v475 = vpop.f32.mrb[0].mxu0
      %v476 = vpop.f32.mrb[0].mxu0
      %v477 = vpop.f32.mrb[0].mxu0
      %478 = vdwg.mxu0
      %479 = vrot.lane.b32.xlu0 %v360, 112
      %v480 = vpop.permute.xlu0 %479
      %481 = vrot.lane.b32.xlu0 %v365, 112
      %v482 = vpop.permute.xlu0 %481
      %v484 = vsel %vm249, %v480, 0
      %v487 = vsel %vm249, %v482, 0
      %489 = vmatprep.subr.bf16.mxu0 0
      %490 = vmatpush1.bf16.xpose.msra.mxu0 %v487
      %491 = vmatprep.subr.bf16.mxu0 0
      %492 = vmatpush1.bf16.xpose.msra.mxu0 0
      %493 = vmatprep.subr.bf16.mxu0 0
      %494 = vmatpush1.bf16.xpose.msra.mxu0 0
      %495 = vmatprep.subr.bf16.mxu0 0
      %496 = vmatpush1.bf16.xpose.msra.mxu0 0
      %497 = vmatprep.subr.bf16.mxu0 0
      %498 = vmatpush1.bf16.xpose.msra.mxu0 0
      %499 = vmatprep.subr.bf16.mxu0 0
      %500 = vmatpush1.bf16.xpose.msra.mxu0 0
      %501 = vmatprep.subr.bf16.mxu0 0
      %502 = vmatpush1.bf16.xpose.msra.mxu0 0
      %503 = vmatprep.subr.bf16.mxu0 0
      %504 = vmatpush1.bf16.xpose.msra.mxu0 0
      %505 = vmatprep.subr.bf16.mxu0 0
      %506 = vmatpush1.bf16.xpose.msra.mxu0 0
      %507 = vmatprep.subr.bf16.mxu0 0
      %508 = vmatpush1.bf16.xpose.msra.mxu0 0
      %509 = vmatprep.subr.bf16.mxu0 0
      %510 = vmatpush1.bf16.xpose.msra.mxu0 0
      %511 = vmatprep.subr.bf16.mxu0 0
      %512 = vmatpush1.bf16.xpose.msra.mxu0 0
      %513 = vmatprep.subr.bf16.mxu0 0
      %514 = vmatpush1.bf16.xpose.msra.mxu0 0
      %515 = vmatprep.subr.bf16.mxu0 0
      %516 = vmatpush1.bf16.xpose.msra.mxu0 0
      %517 = vmatprep.subr.bf16.mxu0 0
      %518 = vmatpush1.bf16.xpose.msra.mxu0 0
      %519 = vmatprep.subr.bf16.mxu0 0
      %520 = vmatpush1.bf16.xpose.msra.mxu0 0
      %521 = vmatprep.mubr.bf16.mxu0 0
      %522 = vmatmul.mubr.bf16.gmra.mrb[0].mxu0 %v484
      %v523 = vpop.f32.mrb[0].mxu0
      %v524 = vadd.f32 0.0, %v523
      %v525 = vpop.f32.mrb[0].mxu0
      %v526 = vpop.f32.mrb[0].mxu0
      %v527 = vpop.f32.mrb[0].mxu0
      %528 = vdwg.mxu0
      %v529 = vmul.f32 %v524, 0.35355338
      %v530 = vsel %vm297, %v529, -1e+09
      %v531 = vsel %vm249, %v530, -inf
      %532 = vmax.xlane.f32.xlu0 %v531
      %v533 = vpop.xlane.xlu0 %532
      %v534 = vsub.f32 %v530, %v533
      %v535 = vmul.f32 %v534, 1.442695
      %v536 = vpow.pop %v535
      %v537 = vsel %vm249, %v536, 0.0
      %538 = vadd.xlane.f32.xlu0 %v537
      %v539 = vpop.xlane.xlu0 %538
      %v540 = vrcp.pop %v539
      %v541 = vmul.f32 %v536, %v540
      %v542 = vpack.c.bf16 %v541, %v541
      %543 = vrot.lane.b32.xlu0 %v430, 112
      %v544 = vpop.permute.xlu0 %543
      %v546 = vsel %vm249, %v542, 0
      %v549 = vsel %vm314, %v544, 0
      %551 = vmatprep.subr.bf16.mxu0 0
      %552 = vmatpush1.bf16.msra.mxu0 %v549
      %553 = vmatprep.subr.bf16.mxu0 0
      %554 = vmatpush1.bf16.msra.mxu0 0
      %555 = vmatprep.subr.bf16.mxu0 0
      %556 = vmatpush1.bf16.msra.mxu0 0
      %557 = vmatprep.subr.bf16.mxu0 0
      %558 = vmatpush1.bf16.msra.mxu0 0
      %559 = vmatprep.subr.bf16.mxu0 0
      %560 = vmatpush1.bf16.msra.mxu0 0
      %561 = vmatprep.subr.bf16.mxu0 0
      %562 = vmatpush1.bf16.msra.mxu0 0
      %563 = vmatprep.subr.bf16.mxu0 0
      %564 = vmatpush1.bf16.msra.mxu0 0
      %565 = vmatprep.subr.bf16.mxu0 0
      %566 = vmatpush1.bf16.msra.mxu0 0
      %567 = vmatprep.subr.bf16.mxu0 0
      %568 = vmatpush1.bf16.msra.mxu0 0
      %569 = vmatprep.subr.bf16.mxu0 0
      %570 = vmatpush1.bf16.msra.mxu0 0
      %571 = vmatprep.subr.bf16.mxu0 0
      %572 = vmatpush1.bf16.msra.mxu0 0
      %573 = vmatprep.subr.bf16.mxu0 0
      %574 = vmatpush1.bf16.msra.mxu0 0
      %575 = vmatprep.subr.bf16.mxu0 0
      %576 = vmatpush1.bf16.msra.mxu0 0
      %577 = vmatprep.subr.bf16.mxu0 0
      %578 = vmatpush1.bf16.msra.mxu0 0
      %579 = vmatprep.subr.bf16.mxu0 0
      %580 = vmatpush1.bf16.msra.mxu0 0
      %581 = vmatprep.subr.bf16.mxu0 0
      %582 = vmatpush1.bf16.msra.mxu0 0
      %583 = vmatprep.mubr.bf16.mxu0 0
      %584 = vmatmul.mubr.bf16.gmra.mrb[0].mxu0 %v546
      %v585 = vpop.f32.mrb[0].mxu0
      %v586 = vadd.f32 0.0, %v585
      %v587 = vpop.f32.mrb[0].mxu0
      %v588 = vpop.f32.mrb[0].mxu0
      %v589 = vpop.f32.mrb[0].mxu0
      %590 = vdwg.mxu0
      %591 = vrot.lane.b32.xlu0 %v360, 104
      %v592 = vpop.permute.xlu0 %591
      %593 = vrot.lane.b32.xlu0 %v365, 104
      %v594 = vpop.permute.xlu0 %593
      %v596 = vsel %vm249, %v592, 0
      %v599 = vsel %vm249, %v594, 0
      %601 = vmatprep.subr.bf16.mxu0 0
      %602 = vmatpush1.bf16.xpose.msra.mxu0 %v599
      %603 = vmatprep.subr.bf16.mxu0 0
      %604 = vmatpush1.bf16.xpose.msra.mxu0 0
      %605 = vmatprep.subr.bf16.mxu0 0
      %606 = vmatpush1.bf16.xpose.msra.mxu0 0
      %607 = vmatprep.subr.bf16.mxu0 0
      %608 = vmatpush1.bf16.xpose.msra.mxu0 0
      %609 = vmatprep.subr.bf16.mxu0 0
      %610 = vmatpush1.bf16.xpose.msra.mxu0 0
      %611 = vmatprep.subr.bf16.mxu0 0
      %612 = vmatpush1.bf16.xpose.msra.mxu0 0
      %613 = vmatprep.subr.bf16.mxu0 0
      %614 = vmatpush1.bf16.xpose.msra.mxu0 0
      %615 = vmatprep.subr.bf16.mxu0 0
      %616 = vmatpush1.bf16.xpose.msra.mxu0 0
      %617 = vmatprep.subr.bf16.mxu0 0
      %618 = vmatpush1.bf16.xpose.msra.mxu0 0
      %619 = vmatprep.subr.bf16.mxu0 0
      %620 = vmatpush1.bf16.xpose.msra.mxu0 0
      %621 = vmatprep.subr.bf16.mxu0 0
      %622 = vmatpush1.bf16.xpose.msra.mxu0 0
      %623 = vmatprep.subr.bf16.mxu0 0
      %624 = vmatpush1.bf16.xpose.msra.mxu0 0
      %625 = vmatprep.subr.bf16.mxu0 0
      %626 = vmatpush1.bf16.xpose.msra.mxu0 0
      %627 = vmatprep.subr.bf16.mxu0 0
      %628 = vmatpush1.bf16.xpose.msra.mxu0 0
      %629 = vmatprep.subr.bf16.mxu0 0
      %630 = vmatpush1.bf16.xpose.msra.mxu0 0
      %631 = vmatprep.subr.bf16.mxu0 0
      %632 = vmatpush1.bf16.xpose.msra.mxu0 0
      %633 = vmatprep.mubr.bf16.mxu0 0
      %634 = vmatmul.mubr.bf16.gmra.mrb[0].mxu0 %v596
      %v635 = vpop.f32.mrb[0].mxu0
      %v636 = vadd.f32 0.0, %v635
      %v637 = vpop.f32.mrb[0].mxu0
      %v638 = vpop.f32.mrb[0].mxu0
      %v639 = vpop.f32.mrb[0].mxu0
      %640 = vdwg.mxu0
      %v641 = vmul.f32 %v636, 0.35355338
      %v642 = vsel %vm297, %v641, -1e+09
      %v643 = vsel %vm249, %v642, -inf
      %644 = vmax.xlane.f32.xlu0 %v643
      %v645 = vpop.xlane.xlu0 %644
      %v646 = vsub.f32 %v642, %v645
      %v647 = vmul.f32 %v646, 1.442695
      %v648 = vpow.pop %v647
      %v649 = vsel %vm249, %v648, 0.0
      %650 = vadd.xlane.f32.xlu0 %v649
      %v651 = vpop.xlane.xlu0 %650
      %v652 = vrcp.pop %v651
      %v653 = vmul.f32 %v648, %v652
      %v654 = vpack.c.bf16 %v653, %v653
      %655 = vrot.lane.b32.xlu0 %v430, 104
      %v656 = vpop.permute.xlu0 %655
      %v658 = vsel %vm249, %v654, 0
      %v661 = vsel %vm314, %v656, 0
      %663 = vmatprep.subr.bf16.mxu0 0
      %664 = vmatpush1.bf16.msra.mxu0 %v661
      %665 = vmatprep.subr.bf16.mxu0 0
      %666 = vmatpush1.bf16.msra.mxu0 0
      %667 = vmatprep.subr.bf16.mxu0 0
      %668 = vmatpush1.bf16.msra.mxu0 0
      %669 = vmatprep.subr.bf16.mxu0 0
      %670 = vmatpush1.bf16.msra.mxu0 0
      %671 = vmatprep.subr.bf16.mxu0 0
      %672 = vmatpush1.bf16.msra.mxu0 0
      %673 = vmatprep.subr.bf16.mxu0 0
      %674 = vmatpush1.bf16.msra.mxu0 0
      %675 = vmatprep.subr.bf16.mxu0 0
      %676 = vmatpush1.bf16.msra.mxu0 0
      %677 = vmatprep.subr.bf16.mxu0 0
      %678 = vmatpush1.bf16.msra.mxu0 0
      %679 = vmatprep.subr.bf16.mxu0 0
      %680 = vmatpush1.bf16.msra.mxu0 0
      %681 = vmatprep.subr.bf16.mxu0 0
      %682 = vmatpush1.bf16.msra.mxu0 0
      %683 = vmatprep.subr.bf16.mxu0 0
      %684 = vmatpush1.bf16.msra.mxu0 0
      %685 = vmatprep.subr.bf16.mxu0 0
      %686 = vmatpush1.bf16.msra.mxu0 0
      %687 = vmatprep.subr.bf16.mxu0 0
      %688 = vmatpush1.bf16.msra.mxu0 0
      %689 = vmatprep.subr.bf16.mxu0 0
      %690 = vmatpush1.bf16.msra.mxu0 0
      %691 = vmatprep.subr.bf16.mxu0 0
      %692 = vmatpush1.bf16.msra.mxu0 0
      %693 = vmatprep.subr.bf16.mxu0 0
      %694 = vmatpush1.bf16.msra.mxu0 0
      %695 = vmatprep.mubr.bf16.mxu0 0
      %696 = vmatmul.mubr.bf16.gmra.mrb[0].mxu0 %v658
      %v697 = vpop.f32.mrb[0].mxu0
      %v698 = vadd.f32 0.0, %v697
      %v699 = vpop.f32.mrb[0].mxu0
      %v700 = vpop.f32.mrb[0].mxu0
      %v701 = vpop.f32.mrb[0].mxu0
      %702 = vdwg.mxu0
      %704 = vrot.lane.b32.xlu0 %v474, 8
      %v705 = vpop.permute.xlu0 %704
      %708 = vrot.lane.b32.xlu0 %v586, 16
      %v709 = vpop.permute.xlu0 %708
      %712 = vrot.lane.b32.xlu0 %v698, 24
      %v713 = vpop.permute.xlu0 %712
      %v715 = vsel %vm249, %v353, %v705
      %vm716 = vcmask 130048
      %v717 = vsel %vm716, %v715, %v709
      %vm718 = vcmask 195584
      %v719 = vsel %vm718, %v717, %v713
      %vm720 = vcmask 261120
      %721 = vst.msk [vmem:[%s243] sm:$0xff] %vm720, %v719
      %p722 = scmp.lt.s32.totalorder %s15, 1
      %s723 = scalar_select %p722, %s15, 1
      %s724 = smul.addr %s723, 8
      %s725 = scalar_lea.vmem %s4, %s724
      // Predicated region
      $region37: #{_lambda_.26} parent=35 // pred_check
        %p726 = pneg %p137
      $region38: #{_lambda_.26} parent=35 // pred_check_branch
        %728 = sbr.rel (%p726) target = $region40
      $region39: #{_lambda_.26} parent=35 // pred_region
        _
      $region40: #{_lambda_.26} parent=35 // pred_fallthru
        _
    $region36: #{_lambda_.26} parent=5 // pred_fallthru
      _
    %p729 = scmp.le.s32.totalorder 2, %s10
    // Predicated region
    $region41: #{_lambda_.26} parent=5 // pred_check
      %p730 = pneg %p729
    $region42: #{_lambda_.26} parent=5 // pred_check_branch
      %732 = sbr.rel (%p730) target = $region44
    $region43: #{_lambda_.26} parent=5 // pred_region
      %s733 = ssub.s32 %s10, 2
      // Predicated region
      $region45: #{_lambda_.26} parent=43 // pred_check
        %p734 = pneg %p143
      $region46: #{_lambda_.26} parent=43 // pred_check_branch
        %736 = sbr.rel (%p734) target = $region48
      $region47: #{_lambda_.26} parent=43 // pred_region
        %p737 = scmp.lt.s32.totalorder %s16, 1
        %s738 = scalar_select %p737, %s16, 1
        %s739 = smul.addr %s738, 8
        %s740 = scalar_lea.vmem %s4, %s739
      $region48: #{_lambda_.26} parent=43 // pred_fallthru
        _
    $region44: #{_lambda_.26} parent=5 // pred_fallthru
      _
  $region6: #{_lambda_.26} parent=0 // loop_footer
    %s14 = sadd.s32 1, %s10
  $region7: #{_lambda_.26} parent=0 // loop_footer_branch
    %9 = sbr.rel target = $region3
  $region8: #{_lambda_.26} parent=0 // loop_exit
    _

// kernel: _lambda_.37
$region0: #{_lambda_.37}
  #allocation0 [shape = 'u32[]', space=smem, size = 0x4, offset = 0x4, fixed_abs, tag = 'smem constant byte address 0x4 - core index']
  #allocation1 [shape = 'u32[144,128]{1,0:T(1,128)}', space=vmem, size = 0x12000, scoped, tag = 'internal scratch']
  %s0 = inlined_call_operand.vmem [shape: f32[16,32], index: 0, kind: input, shape index: {}]
  %s1 = inlined_call_operand.vmem [shape: f32[32,32], index: 1, kind: input, shape index: {}]
  %s2 = inlined_call_operand.vmem [shape: f32[1,32], index: 2, kind: input, shape index: {}]
  %s3 = inlined_call_operand.vmem [shape: f32[32,32], index: 3, kind: input, shape index: {}]
  %s4 = inlined_call_operand.vmem [shape: f32[1,32], index: 4, kind: input, shape index: {}]
  %s5 = inlined_call_operand.vmem [shape: bf16[16,32], index: 5, kind: output, shape index: {0}]
  %s6 = inlined_call_operand.vmem [shape: bf16[16,32], index: 6, kind: output, shape index: {1}]
  %7 = xla_tuple %s5, %s6
  %s8 = sld [smem:[#allocation0]]
  $region38: #{_lambda_.37} parent=0
    _
  %s10 = ssub.s32 1, %s8
  %s11 = scalar_select 0, %s10, %s8
  // Predicated region
  $region2: #{_lambda_.37} parent=0 // pred_check
    _
  $region3: #{_lambda_.37} parent=0 // pred_check_branch
    %13 = sbr.rel (0) target = $region5
  $region4: #{_lambda_.37} parent=0 // pred_region
    _
  $region5: #{_lambda_.37} parent=0 // pred_fallthru
    _
  // Predicated region
  $region6: #{_lambda_.37} parent=0 // pred_check
    _
  $region7: #{_lambda_.37} parent=0 // pred_check_branch
    %15 = sbr.rel (0) target = $region9
  $region8: #{_lambda_.37} parent=0 // pred_region
    _
  $region9: #{_lambda_.37} parent=0 // pred_fallthru
    _
  // Predicated region
  $region10: #{_lambda_.37} parent=0 // pred_check
    _
  $region11: #{_lambda_.37} parent=0 // pred_check_branch
    %17 = sbr.rel (0) target = $region13
  $region12: #{_lambda_.37} parent=0 // pred_region
    _
  $region13: #{_lambda_.37} parent=0 // pred_fallthru
    _
  // Predicated region
  $region14: #{_lambda_.37} parent=0 // pred_check
    _
  $region15: #{_lambda_.37} parent=0 // pred_check_branch
    %19 = sbr.rel (0) target = $region17
  $region16: #{_lambda_.37} parent=0 // pred_region
    _
  $region17: #{_lambda_.37} parent=0 // pred_fallthru
    _
  // Predicated region
  $region18: #{_lambda_.37} parent=0 // pred_check
    _
  $region19: #{_lambda_.37} parent=0 // pred_check_branch
    %21 = sbr.rel (0) target = $region21
  $region20: #{_lambda_.37} parent=0 // pred_region
    _
  $region21: #{_lambda_.37} parent=0 // pred_fallthru
    _
  %v23 = vld [vmem:[%s0] sm:$0xff]
  %v24 = vld [vmem:[%s0 + $0x8] sm:$0xff]
  %v25 = vpack.c.bf16 %v24, %v23
  %v26 = vld [vmem:[%s1] sm:$0xff]
  %v27 = vld [vmem:[%s1 + $0x8] sm:$0xff]
  %v28 = vld [vmem:[%s1 + $0x10] sm:$0xff]
  %v29 = vld [vmem:[%s1 + $0x18] sm:$0xff]
  %v30 = vpack.c.bf16 %v27, %v26
  %v31 = vpack.c.bf16 %v29, %v28
  %v32 = vld [vmem:[%s2] sm:$0x1]
  %v34 = vlaneseq
  %v35 = vshrl.u32 %v34, 7
  %v36 = vsub.s32 0, %v35
  %v37 = vrot.slane %v32, %v36
  %vm39 = vcmask 261120
  %v41 = vsel %vm39, %v25, 0
  %43 = vmatprep.subr.bf16.mxu0 0
  %44 = vmatpush1.bf16.msra.mxu0 %v30
  %45 = vmatprep.subr.bf16.mxu0 0
  %46 = vmatpush1.bf16.msra.mxu0 %v31
  %47 = vmatprep.subr.bf16.mxu0 0
  %48 = vmatpush1.bf16.msra.mxu0 0
  %49 = vmatprep.subr.bf16.mxu0 0
  %50 = vmatpush1.bf16.msra.mxu0 0
  %51 = vmatprep.subr.bf16.mxu0 0
  %52 = vmatpush1.bf16.msra.mxu0 0
  %53 = vmatprep.subr.bf16.mxu0 0
  %54 = vmatpush1.bf16.msra.mxu0 0
  %55 = vmatprep.subr.bf16.mxu0 0
  %56 = vmatpush1.bf16.msra.mxu0 0
  %57 = vmatprep.subr.bf16.mxu0 0
  %58 = vmatpush1.bf16.msra.mxu0 0
  %59 = vmatprep.subr.bf16.mxu0 0
  %60 = vmatpush1.bf16.msra.mxu0 0
  %61 = vmatprep.subr.bf16.mxu0 0
  %62 = vmatpush1.bf16.msra.mxu0 0
  %63 = vmatprep.subr.bf16.mxu0 0
  %64 = vmatpush1.bf16.msra.mxu0 0
  %65 = vmatprep.subr.bf16.mxu0 0
  %66 = vmatpush1.bf16.msra.mxu0 0
  %67 = vmatprep.subr.bf16.mxu0 0
  %68 = vmatpush1.bf16.msra.mxu0 0
  %69 = vmatprep.subr.bf16.mxu0 0
  %70 = vmatpush1.bf16.msra.mxu0 0
  %71 = vmatprep.subr.bf16.mxu0 0
  %72 = vmatpush1.bf16.msra.mxu0 0
  %73 = vmatprep.subr.bf16.mxu0 0
  %74 = vmatpush1.bf16.msra.mxu0 0
  %75 = vmatprep.mubr.bf16.mxu0 0
  %76 = vmatmul.mubr.bf16.gmra.mrb[0].mxu0 %v41
  %v77 = vpop.f32.mrb[0].mxu0
  %v78 = vadd.f32 %v37, %v77
  %v79 = vpop.f32.mrb[0].mxu0
  %v80 = vpop.f32.mrb[0].mxu0
  %v81 = vadd.f32 %v37, %v80
  %v82 = vpop.f32.mrb[0].mxu0
  %83 = vdwg.mxu0
  %v84 = vpack.c.bf16 %v81, %v78
  %v86 = vunpack.c.l.b16 %v84
  %v87 = vunpack.c.h.b16 %v84
  %v88 = vpack.c.b16 %v86, %v86
  %v89 = vpack.c.b16 %v87, %v87
  %vm92 = vcmask 257024
  %93 = vst.msk [vmem:[%s5] sm:$0xf] %vm92, %v88
  %94 = vst.msk [vmem:[%s5 + $0x4] sm:$0xf] %vm92, %v89
  %v95 = vld [vmem:[%s3] sm:$0xff]
  %v96 = vld [vmem:[%s3 + $0x8] sm:$0xff]
  %v97 = vld [vmem:[%s3 + $0x10] sm:$0xff]
  %v98 = vld [vmem:[%s3 + $0x18] sm:$0xff]
  %v99 = vpack.c.bf16 %v96, %v95
  %v100 = vpack.c.bf16 %v98, %v97
  %v101 = vld [vmem:[%s4] sm:$0x1]
  %v103 = vlaneseq
  %v104 = vshrl.u32 %v103, 7
  %v105 = vsub.s32 0, %v104
  %v106 = vrot.slane %v101, %v105
  %108 = vmatprep.subr.bf16.mxu0 0
  %109 = vmatpush1.bf16.msra.mxu0 %v99
  %110 = vmatprep.subr.bf16.mxu0 0
  %111 = vmatpush1.bf16.msra.mxu0 %v100
  %112 = vmatprep.subr.bf16.mxu0 0
  %113 = vmatpush1.bf16.msra.mxu0 0
  %114 = vmatprep.subr.bf16.mxu0 0
  %115 = vmatpush1.bf16.msra.mxu0 0
  %116 = vmatprep.subr.bf16.mxu0 0
  %117 = vmatpush1.bf16.msra.mxu0 0
  %118 = vmatprep.subr.bf16.mxu0 0
  %119 = vmatpush1.bf16.msra.mxu0 0
  %120 = vmatprep.subr.bf16.mxu0 0
  %121 = vmatpush1.bf16.msra.mxu0 0
  %122 = vmatprep.subr.bf16.mxu0 0
  %123 = vmatpush1.bf16.msra.mxu0 0
  %124 = vmatprep.subr.bf16.mxu0 0
  %125 = vmatpush1.bf16.msra.mxu0 0
  %126 = vmatprep.subr.bf16.mxu0 0
  %127 = vmatpush1.bf16.msra.mxu0 0
  %128 = vmatprep.subr.bf16.mxu0 0
  %129 = vmatpush1.bf16.msra.mxu0 0
  %130 = vmatprep.subr.bf16.mxu0 0
  %131 = vmatpush1.bf16.msra.mxu0 0
  %132 = vmatprep.subr.bf16.mxu0 0
  %133 = vmatpush1.bf16.msra.mxu0 0
  %134 = vmatprep.subr.bf16.mxu0 0
  %135 = vmatpush1.bf16.msra.mxu0 0
  %136 = vmatprep.subr.bf16.mxu0 0
  %137 = vmatpush1.bf16.msra.mxu0 0
  %138 = vmatprep.subr.bf16.mxu0 0
  %139 = vmatpush1.bf16.msra.mxu0 0
  %140 = vmatprep.mubr.bf16.mxu0 0
  %141 = vmatmul.mubr.bf16.gmra.mrb[0].mxu0 %v41
  %v142 = vpop.f32.mrb[0].mxu0
  %v143 = vadd.f32 %v106, %v142
  %v144 = vpop.f32.mrb[0].mxu0
  %v145 = vpop.f32.mrb[0].mxu0
  %v146 = vadd.f32 %v106, %v145
  %v147 = vpop.f32.mrb[0].mxu0
  %148 = vdwg.mxu0
  %v149 = vpack.c.bf16 %v146, %v143
  %v151 = vunpack.c.l.b16 %v149
  %v152 = vunpack.c.h.b16 %v149
  %v153 = vpack.c.b16 %v151, %v151
  %v154 = vpack.c.b16 %v152, %v152
  %157 = vst.msk [vmem:[%s6] sm:$0xf] %vm92, %v153
  %158 = vst.msk [vmem:[%s6 + $0x4] sm:$0xf] %vm92, %v154
  // Predicated region
  $region22: #{_lambda_.37} parent=0 // pred_check
    _
  $region23: #{_lambda_.37} parent=0 // pred_check_branch
    %160 = sbr.rel (0) target = $region25
  $region24: #{_lambda_.37} parent=0 // pred_region
    _
  $region25: #{_lambda_.37} parent=0 // pred_fallthru
    _
  // Predicated region
  $region26: #{_lambda_.37} parent=0 // pred_check
    _
  $region27: #{_lambda_.37} parent=0 // pred_check_branch
    %162 = sbr.rel (0) target = $region29
  $region28: #{_lambda_.37} parent=0 // pred_region
    _
  $region29: #{_lambda_.37} parent=0 // pred_fallthru
    _
  // Predicated region
  $region30: #{_lambda_.37} parent=0 // pred_check
    _
  $region31: #{_lambda_.37} parent=0 // pred_check_branch
    %164 = sbr.rel (0) target = $region33
  $region32: #{_lambda_.37} parent=0 // pred_region
    _
  $region33: #{_lambda_.37} parent=0 // pred_fallthru
    _
  // Predicated region
  $region34: #{_lambda_.37} parent=0 // pred_check
    _
  $region35: #{_lambda_.37} parent=0 // pred_check_branch
    %166 = sbr.rel (0) target = $region37
  $region36: #{_lambda_.37} parent=0 // pred_region
    _
  $region37: #{_lambda_.37} parent=0 // pred_fallthru
    _

// kernel: _lambda_.36
$region0: #{_lambda_.36}
  #allocation0 [shape = 'u32[]', space=smem, size = 0x4, offset = 0x4, fixed_abs, tag = 'smem constant byte address 0x4 - core index']
  #allocation1 [shape = 'u32[144,128]{1,0:T(1,128)}', space=vmem, size = 0x12000, scoped, tag = 'internal scratch']
  %s0 = inlined_call_operand.vmem [shape: f32[16,32], index: 0, kind: input, shape index: {}]
  %s1 = inlined_call_operand.vmem [shape: f32[32,32], index: 1, kind: input, shape index: {}]
  %s2 = inlined_call_operand.vmem [shape: f32[1,32], index: 2, kind: input, shape index: {}]
  %s3 = inlined_call_operand.vmem [shape: bf16[16,32], index: 3, kind: output, shape index: {}]
  %s4 = sld [smem:[#allocation0]]
  $region22: #{_lambda_.36} parent=0
    _
  %s6 = ssub.s32 1, %s4
  %s7 = scalar_select 0, %s6, %s4
  // Predicated region
  $region2: #{_lambda_.36} parent=0 // pred_check
    _
  $region3: #{_lambda_.36} parent=0 // pred_check_branch
    %9 = sbr.rel (0) target = $region5
  $region4: #{_lambda_.36} parent=0 // pred_region
    _
  $region5: #{_lambda_.36} parent=0 // pred_fallthru
    _
  // Predicated region
  $region6: #{_lambda_.36} parent=0 // pred_check
    _
  $region7: #{_lambda_.36} parent=0 // pred_check_branch
    %11 = sbr.rel (0) target = $region9
  $region8: #{_lambda_.36} parent=0 // pred_region
    _
  $region9: #{_lambda_.36} parent=0 // pred_fallthru
    _
  // Predicated region
  $region10: #{_lambda_.36} parent=0 // pred_check
    _
  $region11: #{_lambda_.36} parent=0 // pred_check_branch
    %13 = sbr.rel (0) target = $region13
  $region12: #{_lambda_.36} parent=0 // pred_region
    _
  $region13: #{_lambda_.36} parent=0 // pred_fallthru
    _
  %v15 = vld [vmem:[%s0] sm:$0xff]
  %v16 = vld [vmem:[%s0 + $0x8] sm:$0xff]
  %v17 = vpack.c.bf16 %v16, %v15
  %v18 = vld [vmem:[%s1] sm:$0xff]
  %v19 = vld [vmem:[%s1 + $0x8] sm:$0xff]
  %v20 = vld [vmem:[%s1 + $0x10] sm:$0xff]
  %v21 = vld [vmem:[%s1 + $0x18] sm:$0xff]
  %v22 = vpack.c.bf16 %v19, %v18
  %v23 = vpack.c.bf16 %v21, %v20
  %v24 = vld [vmem:[%s2] sm:$0x1]
  %v26 = vlaneseq
  %v27 = vshrl.u32 %v26, 7
  %v28 = vsub.s32 0, %v27
  %v29 = vrot.slane %v24, %v28
  %vm31 = vcmask 261120
  %v33 = vsel %vm31, %v17, 0
  %35 = vmatprep.subr.bf16.mxu0 0
  %36 = vmatpush1.bf16.msra.mxu0 %v22
  %37 = vmatprep.subr.bf16.mxu0 0
  %38 = vmatpush1.bf16.msra.mxu0 %v23
  %39 = vmatprep.subr.bf16.mxu0 0
  %40 = vmatpush1.bf16.msra.mxu0 0
  %41 = vmatprep.subr.bf16.mxu0 0
  %42 = vmatpush1.bf16.msra.mxu0 0
  %43 = vmatprep.subr.bf16.mxu0 0
  %44 = vmatpush1.bf16.msra.mxu0 0
  %45 = vmatprep.subr.bf16.mxu0 0
  %46 = vmatpush1.bf16.msra.mxu0 0
  %47 = vmatprep.subr.bf16.mxu0 0
  %48 = vmatpush1.bf16.msra.mxu0 0
  %49 = vmatprep.subr.bf16.mxu0 0
  %50 = vmatpush1.bf16.msra.mxu0 0
  %51 = vmatprep.subr.bf16.mxu0 0
  %52 = vmatpush1.bf16.msra.mxu0 0
  %53 = vmatprep.subr.bf16.mxu0 0
  %54 = vmatpush1.bf16.msra.mxu0 0
  %55 = vmatprep.subr.bf16.mxu0 0
  %56 = vmatpush1.bf16.msra.mxu0 0
  %57 = vmatprep.subr.bf16.mxu0 0
  %58 = vmatpush1.bf16.msra.mxu0 0
  %59 = vmatprep.subr.bf16.mxu0 0
  %60 = vmatpush1.bf16.msra.mxu0 0
  %61 = vmatprep.subr.bf16.mxu0 0
  %62 = vmatpush1.bf16.msra.mxu0 0
  %63 = vmatprep.subr.bf16.mxu0 0
  %64 = vmatpush1.bf16.msra.mxu0 0
  %65 = vmatprep.subr.bf16.mxu0 0
  %66 = vmatpush1.bf16.msra.mxu0 0
  %67 = vmatprep.mubr.bf16.mxu0 0
  %68 = vmatmul.mubr.bf16.gmra.mrb[0].mxu0 %v33
  %v69 = vpop.f32.mrb[0].mxu0
  %v70 = vadd.f32 %v29, %v69
  %v71 = vpop.f32.mrb[0].mxu0
  %v72 = vpop.f32.mrb[0].mxu0
  %v73 = vadd.f32 %v29, %v72
  %v74 = vpop.f32.mrb[0].mxu0
  %75 = vdwg.mxu0
  %v76 = vpack.c.bf16 %v73, %v70
  %v78 = vunpack.c.l.b16 %v76
  %v79 = vunpack.c.h.b16 %v76
  %v80 = vpack.c.b16 %v78, %v78
  %v81 = vpack.c.b16 %v79, %v79
  %vm84 = vcmask 257024
  %85 = vst.msk [vmem:[%s3] sm:$0xf] %vm84, %v80
  %86 = vst.msk [vmem:[%s3 + $0x4] sm:$0xf] %vm84, %v81
  // Predicated region
  $region14: #{_lambda_.36} parent=0 // pred_check
    _
  $region15: #{_lambda_.36} parent=0 // pred_check_branch
    %88 = sbr.rel (0) target = $region17
  $region16: #{_lambda_.36} parent=0 // pred_region
    _
  $region17: #{_lambda_.36} parent=0 // pred_fallthru
    _
  // Predicated region
  $region18: #{_lambda_.36} parent=0 // pred_check
    _
  $region19: #{_lambda_.36} parent=0 // pred_check_branch
    %90 = sbr.rel (0) target = $region21
  $region20: #{_lambda_.36} parent=0 // pred_region
    _
  $region21: #{_lambda_.36} parent=0 // pred_fallthru
    _

// kernel: _lambda_.49
$region0: #{_lambda_.49}
  #allocation0 [shape = 'u32[]', space=smem, size = 0x4, offset = 0x4, fixed_abs, tag = 'smem constant byte address 0x4 - core index']
  #allocation1 [shape = 'u32[144,128]{1,0:T(1,128)}', space=vmem, size = 0x12000, scoped, tag = 'internal scratch']
  %s0 = inlined_call_operand.vmem [shape: f32[16,32], index: 0, kind: input, shape index: {}]
  %s1 = inlined_call_operand.vmem [shape: f32[32,32], index: 1, kind: input, shape index: {}]
  %s2 = inlined_call_operand.vmem [shape: f32[1,32], index: 2, kind: input, shape index: {}]
  %s3 = inlined_call_operand.hbm [shape: f32[16,32], index: 3, kind: output, shape index: {}]
  %s4 = sld [smem:[#allocation0]]
  $region22: #{_lambda_.49} parent=0
    _
  %s6 = ssub.s32 1, %s4
  %s7 = scalar_select 0, %s6, %s4
  $region1: #{_lambda_.49} parent=0
    #allocation2 [shape = 'u8[8192]{0}', space=vmem, size = 0x2000, scoped, tag = 'output window, operand 0, single buffered']
    #allocation3 [shape = 's32[1]{0}', space=sflag, size = 0x4, scoped, tag = 'scoped memory for _lambda_.49']
    %8 = vsyncpa [#allocation3], 0
    // Predicated region
    $region2: #{_lambda_.49} parent=1 // pred_check
      _
    $region3: #{_lambda_.49} parent=1 // pred_check_branch
      %10 = sbr.rel (0) target = $region5
    $region4: #{_lambda_.49} parent=1 // pred_region
      _
    $region5: #{_lambda_.49} parent=1 // pred_fallthru
      _
    // Predicated region
    $region6: #{_lambda_.49} parent=1 // pred_check
      _
    $region7: #{_lambda_.49} parent=1 // pred_check_branch
      %12 = sbr.rel (0) target = $region9
    $region8: #{_lambda_.49} parent=1 // pred_region
      _
    $region9: #{_lambda_.49} parent=1 // pred_fallthru
      _
    // Predicated region
    $region10: #{_lambda_.49} parent=1 // pred_check
      _
    $region11: #{_lambda_.49} parent=1 // pred_check_branch
      %14 = sbr.rel (0) target = $region13
    $region12: #{_lambda_.49} parent=1 // pred_region
      _
    $region13: #{_lambda_.49} parent=1 // pred_fallthru
      _
    %v16 = vld [vmem:[%s0] sm:$0xff]
    %v17 = vld [vmem:[%s0 + $0x8] sm:$0xff]
    %v18 = vpack.c.bf16 %v17, %v16
    %v19 = vld [vmem:[%s1] sm:$0xff]
    %v20 = vld [vmem:[%s1 + $0x8] sm:$0xff]
    %v21 = vld [vmem:[%s1 + $0x10] sm:$0xff]
    %v22 = vld [vmem:[%s1 + $0x18] sm:$0xff]
    %v23 = vpack.c.bf16 %v20, %v19
    %v24 = vpack.c.bf16 %v22, %v21
    %v25 = vld [vmem:[%s2] sm:$0x1]
    %v27 = vlaneseq
    %v28 = vshrl.u32 %v27, 7
    %v29 = vsub.s32 0, %v28
    %v30 = vrot.slane %v25, %v29
    %vm32 = vcmask 261120
    %v34 = vsel %vm32, %v18, 0
    %36 = vmatprep.subr.bf16.mxu0 0
    %37 = vmatpush1.bf16.msra.mxu0 %v23
    %38 = vmatprep.subr.bf16.mxu0 0
    %39 = vmatpush1.bf16.msra.mxu0 %v24
    %40 = vmatprep.subr.bf16.mxu0 0
    %41 = vmatpush1.bf16.msra.mxu0 0
    %42 = vmatprep.subr.bf16.mxu0 0
    %43 = vmatpush1.bf16.msra.mxu0 0
    %44 = vmatprep.subr.bf16.mxu0 0
    %45 = vmatpush1.bf16.msra.mxu0 0
    %46 = vmatprep.subr.bf16.mxu0 0
    %47 = vmatpush1.bf16.msra.mxu0 0
    %48 = vmatprep.subr.bf16.mxu0 0
    %49 = vmatpush1.bf16.msra.mxu0 0
    %50 = vmatprep.subr.bf16.mxu0 0
    %51 = vmatpush1.bf16.msra.mxu0 0
    %52 = vmatprep.subr.bf16.mxu0 0
    %53 = vmatpush1.bf16.msra.mxu0 0
    %54 = vmatprep.subr.bf16.mxu0 0
    %55 = vmatpush1.bf16.msra.mxu0 0
    %56 = vmatprep.subr.bf16.mxu0 0
    %57 = vmatpush1.bf16.msra.mxu0 0
    %58 = vmatprep.subr.bf16.mxu0 0
    %59 = vmatpush1.bf16.msra.mxu0 0
    %60 = vmatprep.subr.bf16.mxu0 0
    %61 = vmatpush1.bf16.msra.mxu0 0
    %62 = vmatprep.subr.bf16.mxu0 0
    %63 = vmatpush1.bf16.msra.mxu0 0
    %64 = vmatprep.subr.bf16.mxu0 0
    %65 = vmatpush1.bf16.msra.mxu0 0
    %66 = vmatprep.subr.bf16.mxu0 0
    %67 = vmatpush1.bf16.msra.mxu0 0
    %68 = vmatprep.mubr.bf16.mxu0 0
    %69 = vmatmul.mubr.bf16.gmra.mrb[0].mxu0 %v34
    %v70 = vpop.f32.mrb[0].mxu0
    %v71 = vadd.f32 %v30, %v70
    %v72 = vpop.f32.mrb[0].mxu0
    %v73 = vpop.f32.mrb[0].mxu0
    %v74 = vadd.f32 %v30, %v73
    %v75 = vpop.f32.mrb[0].mxu0
    %76 = vdwg.mxu0
    %77 = vst.msk [vmem:[#allocation2] sm:$0xff] %vm32, %v71
    %78 = vst.msk [vmem:[#allocation2 + $0x8] sm:$0xff] %vm32, %v74
    // Predicated region
    $region14: #{_lambda_.49} parent=1 // pred_check
      _
    $region15: #{_lambda_.49} parent=1 // pred_check_branch
      %80 = sbr.rel (0) target = $region17
    $region16: #{_lambda_.49} parent=1 // pred_region
      %s82 = ssub.s32 256, 256
      %83 = vsyncadd [#allocation3], %s82
      %s84 = sshll.u32 [#allocation2], 4
      %s85 = int_to_ptr.vmem [resolvable:$true] %s84
      %90 = dma.vmem_to_hbm [thread:$0]  %s85, 256, %s3, [#allocation3], 128, 128, 8
    $region17: #{_lambda_.49} parent=1 // pred_fallthru
      _
    // Predicated region
    $region18: #{_lambda_.49} parent=1 // pred_check
      _
    $region19: #{_lambda_.49} parent=1 // pred_check_branch
      %92 = sbr.rel (0) target = $region21
    $region20: #{_lambda_.49} parent=1 // pred_region
      %93 = dma.done [#allocation3], 256
    $region21: #{_lambda_.49} parent=1 // pred_fallthru
      _
    %94 = vsyncpa [#allocation3], 1

</llo_original>
